<compile_context>
chip_gen: v6e
topology: v6e:2x2x1
jax: 0.10.0
libtpu: 0.0.40
codegen_flags: <defaults>
</compile_context>

<pallas_src>
import functools

import jax
import jax.numpy as jnp
from jax.experimental import pallas as pl
from jax.experimental.pallas import tpu as pltpu

F_PAD = 128   # lane-dense padded feature width (all layer dims <= 128)
TM = 256      # output row tile (256 suits v5e 128-wide and v6e/v7x 256-wide MXU)
TK = 256      # adjacency column tile (reduction axis)


def _round_up(x, m):
    return (x + m - 1) // m * m


def _vmem_limit_bytes():
    """Generation-aware scoped-VMEM budget: ~80% of physical capacity."""
    try:
        cap = pltpu.get_tpu_info().vmem_capacity_bytes
        return int(cap * 0.8)
    except Exception:
        return 48 * 1024 * 1024  # safe on every generation (v7x has 64 MiB)


def gcn_layer_kernel(a_ref, x_ref, w_ref, b_ref, dk_ref, di_ref, *rest,
                     final, dim_out, tk):
    """One GCNConv layer: out = act( D^-1/2 (A_hat (D^-1/2 (X W))) + b ).

    a_ref  : (TM, TK)     int8  streamed tile of the 0/1 adjacency A + I
    x_ref  : (N_pad, 128) bf16  resident node features of this layer
    w_ref  : (128, 128)   bf16  resident weights (zero padded)
    b_ref  : (1, 128)     f32   resident bias (zero padded)
    dk_ref : (TK, 1)      f32   d^-1/2 for the source-node (column) block
    di_ref : (TM, 1)      f32   d^-1/2 for the output-row block
    rest   : hidden layer  -> (out_ref (TM,128) bf16, acc_ref (TM,128) f32)
             final layer   -> (logits_ref, logp_ref (TM,128) f32, acc_ref)
    """
    if final:
        logits_ref, logp_ref, acc_ref = rest
    else:
        out_ref, acc_ref = rest

    k = pl.program_id(1)

    @pl.when(k == 0)
    def _init():
        acc_ref[...] = jnp.zeros_like(acc_ref)

    # Fused feature transform for the k-th block of source nodes (recomputed
    # per row tile; hidden under the HBM-bound A stream):
    #   z_k = D_k^{-1/2} (X_k @ W)         (normalization applied in f32)
    row0 = pl.multiple_of(k * tk, tk)
    xk = x_ref[pl.ds(row0, tk), :]
    z = jnp.dot(xk, w_ref[...], preferred_element_type=jnp.float32)
    z = z * dk_ref[...]

    # Aggregate this column block: acc += A_hat[i, k] @ z_k
    # (int8 0/1 tile widened to bf16 MXU operand, f32 accumulation).
    a = a_ref[...].astype(jnp.float32).astype(jnp.bfloat16)
    acc_ref[...] += jnp.dot(a, z.astype(jnp.bfloat16),
                            preferred_element_type=jnp.float32)

    @pl.when(k == pl.num_programs(1) - 1)
    def _finalize():
        h = acc_ref[...] * di_ref[...] + b_ref[...]
        if not final:
            out_ref[...] = jnp.maximum(h, 0.0).astype(out_ref.dtype)
        else:
            # Store logits immediately; keep the softmax live-set small.
            logits_ref[...] = h
            lane = jax.lax.broadcasted_iota(jnp.int32, h.shape, 1)
            valid = lane < dim_out
            m = jnp.max(jnp.where(valid, h, jnp.float32(-1e30)),
                        axis=1, keepdims=True)
            s = h - m
            e = jnp.where(valid, jnp.exp(s), 0.0)
            lse = jnp.log(jnp.sum(e, axis=1, keepdims=True))
            logp_ref[...] = jnp.where(valid, s - lse, 0.0)


def _gcn_layer(a_hat, d_inv_sqrt, x, w, b, *, final, dim_out):
    """Run one row-tiled GCNConv layer as a pallas_call."""
    n_pad = a_hat.shape[0]
    f = F_PAD
    assert n_pad % TM == 0 and n_pad % TK == 0
    grid = (n_pad // TM, n_pad // TK)

    in_specs = [
        pl.BlockSpec((TM, TK), lambda i, k: (i, k)),       # A_hat (streamed)
        pl.BlockSpec((n_pad, f), lambda i, k: (0, 0)),     # X (resident)
        pl.BlockSpec((f, f), lambda i, k: (0, 0)),         # W (resident)
        pl.BlockSpec((1, f), lambda i, k: (0, 0)),         # b (resident)
        pl.BlockSpec((TK, 1), lambda i, k: (k, 0)),        # d^-1/2 pre-scale
        pl.BlockSpec((TM, 1), lambda i, k: (i, 0)),        # d^-1/2 post-scale
    ]
    if final:
        out_shape = (jax.ShapeDtypeStruct((n_pad, f), jnp.float32),
                     jax.ShapeDtypeStruct((n_pad, f), jnp.float32))
        out_specs = (pl.BlockSpec((TM, f), lambda i, k: (i, 0)),
                     pl.BlockSpec((TM, f), lambda i, k: (i, 0)))
    else:
        out_shape = jax.ShapeDtypeStruct((n_pad, f), jnp.bfloat16)
        out_specs = pl.BlockSpec((TM, f), lambda i, k: (i, 0))

    return pl.pallas_call(
        functools.partial(gcn_layer_kernel, final=final, dim_out=dim_out,
                          tk=TK),
        grid=grid,
        in_specs=in_specs,
        out_specs=out_specs,
        out_shape=out_shape,
        scratch_shapes=[pltpu.VMEM((TM, f), jnp.float32)],
        compiler_params=pltpu.CompilerParams(
            dimension_semantics=("parallel", "arbitrary"),
            vmem_limit_bytes=_vmem_limit_bytes()),
    )(a_hat, x, w, b, d_inv_sqrt, d_inv_sqrt)


def _pad2d(arr, rows, cols, dtype):
    out = jnp.zeros((rows, cols), dtype)
    return out.at[: arr.shape[0], : arr.shape[1]].set(arr.astype(dtype))


def build_graph(edge_index, num_nodes, n_pad):
    """Build the padded 0/1 adjacency (A + I, int8) and f32 d^-1/2 directly
    at the kernel shapes/dtypes (no second O(N^2) materialization).  Matches
    PyG gcn_norm for simple graphs (duplicate edges are deduped)."""
    src = edge_index[0].astype(jnp.int32)
    dst = edge_index[1].astype(jnp.int32)
    a = jnp.zeros((n_pad, n_pad), jnp.int8)
    a = a.at[dst, src].set(jnp.int8(1))            # messages flow src -> dst
    diag = jnp.arange(num_nodes, dtype=jnp.int32)
    a = a.at[diag, diag].set(jnp.int8(1))          # self-loops (idempotent)
    deg = jnp.sum(a, axis=1, dtype=jnp.float32)
    d_inv_sqrt = jnp.where(deg > 0, jax.lax.rsqrt(deg), 0.0)
    return a, d_inv_sqrt.reshape(n_pad, 1)


def gcn_forward(x, a_hat, d_inv_sqrt, params):
    """Eval-mode forward of the 3-layer GCN (dropout is identity)."""
    w1, b1, w2, b2, w3, b3 = params
    n = x.shape[0]
    dim_out = w3.shape[1]
    n_pad = a_hat.shape[0]
    f = F_PAD
    assert max(w1.shape[0], w1.shape[1], w2.shape[1], w3.shape[1]) <= f

    x_p = _pad2d(x, n_pad, f, jnp.bfloat16)
    w1p = _pad2d(w1, f, f, jnp.bfloat16)
    w2p = _pad2d(w2, f, f, jnp.bfloat16)
    w3p = _pad2d(w3, f, f, jnp.bfloat16)
    b1p = _pad2d(b1.reshape(1, -1), 1, f, jnp.float32)
    b2p = _pad2d(b2.reshape(1, -1), 1, f, jnp.float32)
    b3p = _pad2d(b3.reshape(1, -1), 1, f, jnp.float32)

    h = _gcn_layer(a_hat, d_inv_sqrt, x_p, w1p, b1p, final=False, dim_out=0)
    h = _gcn_layer(a_hat, d_inv_sqrt, h, w2p, b2p, final=False, dim_out=0)
    logits_p, logp_p = _gcn_layer(a_hat, d_inv_sqrt, h, w3p, b3p,
                                  final=True, dim_out=dim_out)

    return logits_p[:n, :dim_out], logp_p[:n, :dim_out]


def gcn_reference(a_hat, d_inv_sqrt, x, params):
    """Pure-JAX f32 reference (eval-mode forward of the PyTorch module)."""
    w1, b1, w2, b2, w3, b3 = params
    n = x.shape[0]
    a_norm = (d_inv_sqrt * a_hat.astype(jnp.float32)
              * d_inv_sqrt.reshape(1, -1))[:n, :n]
    h = jnp.maximum(a_norm @ (x @ w1) + b1, 0.0)
    h = jnp.maximum(a_norm @ (h @ w2) + b2, 0.0)
    logits = a_norm @ (h @ w3) + b3
    return logits, jax.nn.log_softmax(logits, axis=1)


def glorot(key, fan_in, fan_out):
    limit = jnp.sqrt(6.0 / (fan_in + fan_out))
    return jax.random.uniform(key, (fan_in, fan_out), jnp.float32,
                              minval=-limit, maxval=limit)


if __name__ == "__main__":
    # Small shapes consistent with the module: N nodes, 3-layer GCN.
    N, DIM_IN, DIM_G, DIM_H, DIM_OUT = 8, 16, 32, 16, 8

    key = jax.random.PRNGKey(0)
    kx, k1, k2, k3 = jax.random.split(key, 4)

    # Node features
    x = jax.random.normal(kx, (N, DIM_IN), jnp.float32)

    # Deterministic ring graph (undirected): i <-> (i+1) % N
    fwd = jnp.arange(N, dtype=jnp.int32)
    nxt = (fwd + 1) % N
    edge_index = jnp.stack(
        [jnp.concatenate([fwd, nxt]), jnp.concatenate([nxt, fwd])], axis=0
    )  # shape (2, 2N)

    # Deterministic parameter init (glorot weights, zero biases).
    params = (
        glorot(k1, DIM_IN, DIM_G), jnp.zeros((1, DIM_G), jnp.float32),
        glorot(k2, DIM_G, DIM_H), jnp.zeros((1, DIM_H), jnp.float32),
        glorot(k3, DIM_H, DIM_OUT), jnp.zeros((1, DIM_OUT), jnp.float32),
    )

    # Build the padded graph once (cacheable across forward calls).
    n_pad = _round_up(max(N, 1), max(TM, TK))
    a_hat, d_inv_sqrt = build_graph(edge_index, N, n_pad)

    logits, log_probs = gcn_forward(x, a_hat, d_inv_sqrt, params)
    jax.block_until_ready((logits, log_probs))

    assert logits.shape == (N, DIM_OUT)
    assert log_probs.shape == (N, DIM_OUT)

    # Correctness vs. f32 reference (bf16 MXU operands => loose tolerance).
    ref_logits, ref_logp = gcn_reference(a_hat, d_inv_sqrt, x, params)
    assert jnp.allclose(logits, ref_logits, atol=5e-2, rtol=5e-2)
    assert jnp.allclose(log_probs, ref_logp, atol=5e-2, rtol=5e-2)

    print("KERNEL_OK")
</pallas_src>

<mosaic_0001>
module attributes {stable_mosaic.version = 11 : i64} {
  func.func @gcn_layer_kernel(%arg0: i32, %arg1: i32, %arg2: memref<256x256xi8, #tpu.memory_space<vmem>>, %arg3: memref<256x128xbf16, #tpu.memory_space<vmem>>, %arg4: memref<128x128xbf16, #tpu.memory_space<vmem>>, %arg5: memref<1x128xf32, #tpu.memory_space<vmem>>, %arg6: memref<256x1xf32, #tpu.memory_space<vmem>>, %arg7: memref<256x1xf32, #tpu.memory_space<vmem>>, %arg8: memref<256x128xbf16, #tpu.memory_space<vmem>>, %arg9: memref<256x128xf32, #tpu.memory_space<vmem>>) attributes {dimension_semantics = [#tpu.dimension_semantics<parallel>, #tpu.dimension_semantics<arbitrary>], iteration_bounds = array<i64: 1, 1>, scalar_prefetch = 0 : i64, scratch_operands = 1 : i64, tpu.core_type = #tpu.core_type<tc>, window_params = [{transform_indices = @transform_0, window_bounds = array<i64: 256, 256>}, {pipeline_mode = #tpu.pipeline_mode<synchronous>, transform_indices = @transform_1, window_bounds = array<i64: 256, 128>}, {pipeline_mode = #tpu.pipeline_mode<synchronous>, transform_indices = @transform_2, window_bounds = array<i64: 128, 128>}, {pipeline_mode = #tpu.pipeline_mode<synchronous>, transform_indices = @transform_3, window_bounds = array<i64: 1, 128>}, {transform_indices = @transform_4, window_bounds = array<i64: 256, 1>}, {transform_indices = @transform_5, window_bounds = array<i64: 256, 1>}, {transform_indices = @transform_6, window_bounds = array<i64: 256, 128>}]} {
    %c0_i32 = arith.constant 0 : i32
    %0 = arith.cmpi eq, %arg1, %c0_i32 : i32
    %1 = arith.extui %0 : i1 to i32
    %c0_i32_0 = arith.constant 0 : i32
    %2 = arith.cmpi ne, %1, %c0_i32_0 : i32
    scf.if %2 {
      %cst_14 = arith.constant 0.000000e+00 : f32
      %23 = vector.broadcast %cst_14 : f32 to vector<256x128xf32>
      %c0_15 = arith.constant 0 : index
      %c0_16 = arith.constant 0 : index
      %24 = vector.load %arg9[%c0_15, %c0_16] : memref<256x128xf32, #tpu.memory_space<vmem>>, vector<256x128xf32>
      tpu.vector_store %arg9[%c0_15, %c0_16], %23 {strides = array<i32>} : memref<256x128xf32, #tpu.memory_space<vmem>>, vector<256x128xf32>,
    } else {
    }
    %c256_i32 = arith.constant 256 : i32
    %3 = arith.muli %arg1, %c256_i32 : i32
    %4 = tpu.assume_multiple %3, 256 : i32
    %5 = arith.index_cast %4 : i32 to index
    %c0 = arith.constant 0 : index
    %6 = vector.load %arg3[%5, %c0] : memref<256x128xbf16, #tpu.memory_space<vmem>>, vector<256x128xbf16>
    %c0_1 = arith.constant 0 : index
    %c0_2 = arith.constant 0 : index
    %7 = vector.load %arg4[%c0_1, %c0_2] : memref<128x128xbf16, #tpu.memory_space<vmem>>, vector<128x128xbf16>
    %cst = arith.constant dense<0.000000e+00> : vector<256x128xf32>
    %8 = tpu.matmul %6, %7, %cst {dimension_numbers = #tpu.dot_dimension_numbers<[1], [0], [0], [1], [0, 0, 1, 1], [], []>} : vector<256x128xbf16>, vector<128x128xbf16>, vector<256x128xf32> -> vector<256x128xf32>
    %c0_3 = arith.constant 0 : index
    %c0_4 = arith.constant 0 : index
    %9 = vector.load %arg6[%c0_3, %c0_4] : memref<256x1xf32, #tpu.memory_space<vmem>>, vector<256x1xf32>
    %10 = vector.broadcast %9 : vector<256x1xf32> to vector<256x128xf32>
    %11 = arith.mulf %8, %10 : vector<256x128xf32>
    %c0_5 = arith.constant 0 : index
    %c0_6 = arith.constant 0 : index
    %12 = vector.load %arg2[%c0_5, %c0_6] : memref<256x256xi8, #tpu.memory_space<vmem>>, vector<256x256xi8>
    %13 = arith.sitofp %12 : vector<256x256xi8> to vector<256x256xf32>
    %14 = arith.truncf %13 : vector<256x256xf32> to vector<256x256xbf16>
    %c0_7 = arith.constant 0 : index
    %c0_8 = arith.constant 0 : index
    %15 = vector.load %arg9[%c0_7, %c0_8] : memref<256x128xf32, #tpu.memory_space<vmem>>, vector<256x128xf32>
    %16 = arith.truncf %11 : vector<256x128xf32> to vector<256x128xbf16>
    %cst_9 = arith.constant dense<0.000000e+00> : vector<256x128xf32>
    %17 = tpu.matmul %14, %16, %cst_9 {dimension_numbers = #tpu.dot_dimension_numbers<[1], [0], [0], [1], [0, 0, 1, 1], [], []>} : vector<256x256xbf16>, vector<256x128xbf16>, vector<256x128xf32> -> vector<256x128xf32>
    %18 = arith.addf %15, %17 : vector<256x128xf32>
    %c0_10 = arith.constant 0 : index
    %c0_11 = arith.constant 0 : index
    %19 = vector.load %arg9[%c0_10, %c0_11] : memref<256x128xf32, #tpu.memory_space<vmem>>, vector<256x128xf32>
    tpu.vector_store %arg9[%c0_10, %c0_11], %18 {strides = array<i32>} : memref<256x128xf32, #tpu.memory_space<vmem>>, vector<256x128xf32>,
    %c0_i32_12 = arith.constant 0 : i32
    %20 = arith.cmpi eq, %arg1, %c0_i32_12 : i32
    %21 = arith.extui %20 : i1 to i32
    %c0_i32_13 = arith.constant 0 : i32
    %22 = arith.cmpi ne, %21, %c0_i32_13 : i32
    scf.if %22 {
      %c0_14 = arith.constant 0 : index
      %c0_15 = arith.constant 0 : index
      %23 = vector.load %arg9[%c0_14, %c0_15] : memref<256x128xf32, #tpu.memory_space<vmem>>, vector<256x128xf32>
      %c0_16 = arith.constant 0 : index
      %c0_17 = arith.constant 0 : index
      %24 = vector.load %arg7[%c0_16, %c0_17] : memref<256x1xf32, #tpu.memory_space<vmem>>, vector<256x1xf32>
      %25 = vector.broadcast %24 : vector<256x1xf32> to vector<256x128xf32>
      %26 = arith.mulf %23, %25 : vector<256x128xf32>
      %c0_18 = arith.constant 0 : index
      %c0_19 = arith.constant 0 : index
      %27 = vector.load %arg5[%c0_18, %c0_19] : memref<1x128xf32, #tpu.memory_space<vmem>>, vector<1x128xf32>
      %28 = vector.broadcast %27 : vector<1x128xf32> to vector<256x128xf32>
      %29 = arith.addf %26, %28 : vector<256x128xf32>
      %cst_20 = arith.constant 0.000000e+00 : f32
      %30 = vector.broadcast %cst_20 : f32 to vector<256x128xf32>
      %31 = arith.maximumf %29, %30 : vector<256x128xf32>
      %32 = arith.truncf %31 : vector<256x128xf32> to vector<256x128xbf16>
      %c0_21 = arith.constant 0 : index
      %c0_22 = arith.constant 0 : index
      %33 = vector.load %arg8[%c0_21, %c0_22] : memref<256x128xbf16, #tpu.memory_space<vmem>>, vector<256x128xbf16>
      tpu.vector_store %arg8[%c0_21, %c0_22], %32 {strides = array<i32>} : memref<256x128xbf16, #tpu.memory_space<vmem>>, vector<256x128xbf16>,
    } else {
    }
    return
  }
  func.func @transform_0(%arg0: i32, %arg1: i32) -> (i32, i32) {
    %c0_i32 = arith.constant 0 : i32
    return %arg0, %arg1 : i32, i32
  }
  func.func @transform_1(%arg0: i32, %arg1: i32) -> (i32, i32) {
    %c0_i32 = arith.constant 0 : i32
    %c0_i32_0 = arith.constant 0 : i32
    %c0_i32_1 = arith.constant 0 : i32
    return %c0_i32, %c0_i32_0 : i32, i32
  }
  func.func @transform_2(%arg0: i32, %arg1: i32) -> (i32, i32) {
    %c0_i32 = arith.constant 0 : i32
    %c0_i32_0 = arith.constant 0 : i32
    %c0_i32_1 = arith.constant 0 : i32
    return %c0_i32, %c0_i32_0 : i32, i32
  }
  func.func @transform_3(%arg0: i32, %arg1: i32) -> (i32, i32) {
    %c0_i32 = arith.constant 0 : i32
    %c0_i32_0 = arith.constant 0 : i32
    %c0_i32_1 = arith.constant 0 : i32
    return %c0_i32, %c0_i32_0 : i32, i32
  }
  func.func @transform_4(%arg0: i32, %arg1: i32) -> (i32, i32) {
    %c0_i32 = arith.constant 0 : i32
    %c0_i32_0 = arith.constant 0 : i32
    return %arg1, %c0_i32 : i32, i32
  }
  func.func @transform_5(%arg0: i32, %arg1: i32) -> (i32, i32) {
    %c0_i32 = arith.constant 0 : i32
    %c0_i32_0 = arith.constant 0 : i32
    return %arg0, %c0_i32 : i32, i32
  }
  func.func @transform_6(%arg0: i32, %arg1: i32) -> (i32, i32) {
    %c0_i32 = arith.constant 0 : i32
    %c0_i32_0 = arith.constant 0 : i32
    return %arg0, %c0_i32 : i32, i32
  }
}

</mosaic_0001>

<llo_original>
// kernel: tpu_custom_call.1
$region0: #{tpu_custom_call.1}
  #allocation0 [shape = 'u32[]', space=smem, size = 0x4, offset = 0x4, fixed_abs, tag = 'smem constant byte address 0x4 - core index']
  #allocation1 [shape = 'u32[144,128]{1,0:T(1,128)}', space=vmem, size = 0x12000, scoped, tag = 'internal scratch']
  #allocation2 [shape = 'f32[256,128]{1,0:T(8,128)}', space=vmem, size = 0x20000, scoped, tag = 'scratch operand']
  %s0 = inlined_call_operand.vmem [shape: s8[256,256], index: 0, kind: input, shape index: {}]
  %s1 = inlined_call_operand.vmem [shape: bf16[256,128], index: 1, kind: input, shape index: {}]
  %s2 = inlined_call_operand.vmem [shape: bf16[128,128], index: 2, kind: input, shape index: {}]
  %s3 = inlined_call_operand.vmem [shape: f32[1,128], index: 3, kind: input, shape index: {}]
  %s4 = inlined_call_operand.vmem [shape: f32[256,1], index: 4, kind: input, shape index: {}]
  %s5 = inlined_call_operand.vmem [shape: f32[256,1], index: 5, kind: input, shape index: {}]
  %s6 = inlined_call_operand.hbm [shape: bf16[256,128], index: 6, kind: output, shape index: {}]
  %s7 = sld [smem:[#allocation0]]
  $region42: #{tpu_custom_call.1} parent=0
    _
  %s9 = ssub.s32 1, %s7
  %s10 = scalar_select 0, %s9, %s7
  $region1: #{tpu_custom_call.1} parent=0
    #allocation3 [shape = 'u8[65536]{0}', space=vmem, size = 0x10000, scoped, tag = 'output window, operand 0, single buffered']
    #allocation4 [shape = 's32[1]{0}', space=sflag, size = 0x4, scoped, tag = 'scoped memory for tpu_custom_call.1']
    %11 = vsyncpa [#allocation4], 0
    // Predicated region
    $region2: #{tpu_custom_call.1} parent=1 // pred_check
      _
    $region3: #{tpu_custom_call.1} parent=1 // pred_check_branch
      %13 = sbr.rel (0) target = $region5
    $region4: #{tpu_custom_call.1} parent=1 // pred_region
      _
    $region5: #{tpu_custom_call.1} parent=1 // pred_fallthru
      _
    // Predicated region
    $region6: #{tpu_custom_call.1} parent=1 // pred_check
      _
    $region7: #{tpu_custom_call.1} parent=1 // pred_check_branch
      %15 = sbr.rel (0) target = $region9
    $region8: #{tpu_custom_call.1} parent=1 // pred_region
      _
    $region9: #{tpu_custom_call.1} parent=1 // pred_fallthru
      _
    // Predicated region
    $region10: #{tpu_custom_call.1} parent=1 // pred_check
      _
    $region11: #{tpu_custom_call.1} parent=1 // pred_check_branch
      %17 = sbr.rel (0) target = $region13
    $region12: #{tpu_custom_call.1} parent=1 // pred_region
      _
    $region13: #{tpu_custom_call.1} parent=1 // pred_fallthru
      _
    // Predicated region
    $region14: #{tpu_custom_call.1} parent=1 // pred_check
      _
    $region15: #{tpu_custom_call.1} parent=1 // pred_check_branch
      %19 = sbr.rel (0) target = $region17
    $region16: #{tpu_custom_call.1} parent=1 // pred_region
      _
    $region17: #{tpu_custom_call.1} parent=1 // pred_fallthru
      _
    // Predicated region
    $region18: #{tpu_custom_call.1} parent=1 // pred_check
      _
    $region19: #{tpu_custom_call.1} parent=1 // pred_check_branch
      %21 = sbr.rel (0) target = $region21
    $region20: #{tpu_custom_call.1} parent=1 // pred_region
      _
    $region21: #{tpu_custom_call.1} parent=1 // pred_fallthru
      _
    // Predicated region
    $region22: #{tpu_custom_call.1} parent=1 // pred_check
      _
    $region23: #{tpu_custom_call.1} parent=1 // pred_check_branch
      %23 = sbr.rel (0) target = $region25
    $region24: #{tpu_custom_call.1} parent=1 // pred_region
      _
    $region25: #{tpu_custom_call.1} parent=1 // pred_fallthru
      _
    %p25 = scmp.eq.s32.totalorder 0, 0
    // Predicated region
    $region26: #{tpu_custom_call.1} parent=1 // pred_check
      %p26 = pneg %p25
    $region27: #{tpu_custom_call.1} parent=1 // pred_check_branch
      %28 = sbr.rel (%p26) target = $region29
    $region28: #{tpu_custom_call.1} parent=1 // pred_region
      %29 = vst [vmem:[#allocation2] sm:$0xff] 0.0
      %30 = vst [vmem:[#allocation2 + $0x8] sm:$0xff] 0.0
      %31 = vst [vmem:[#allocation2 + $0x10] sm:$0xff] 0.0
      %32 = vst [vmem:[#allocation2 + $0x18] sm:$0xff] 0.0
      %33 = vst [vmem:[#allocation2 + $0x20] sm:$0xff] 0.0
      %34 = vst [vmem:[#allocation2 + $0x28] sm:$0xff] 0.0
      %35 = vst [vmem:[#allocation2 + $0x30] sm:$0xff] 0.0
      %36 = vst [vmem:[#allocation2 + $0x38] sm:$0xff] 0.0
      %37 = vst [vmem:[#allocation2 + $0x40] sm:$0xff] 0.0
      %38 = vst [vmem:[#allocation2 + $0x48] sm:$0xff] 0.0
      %39 = vst [vmem:[#allocation2 + $0x50] sm:$0xff] 0.0
      %40 = vst [vmem:[#allocation2 + $0x58] sm:$0xff] 0.0
      %41 = vst [vmem:[#allocation2 + $0x60] sm:$0xff] 0.0
      %42 = vst [vmem:[#allocation2 + $0x68] sm:$0xff] 0.0
      %43 = vst [vmem:[#allocation2 + $0x70] sm:$0xff] 0.0
      %44 = vst [vmem:[#allocation2 + $0x78] sm:$0xff] 0.0
      %45 = vst [vmem:[#allocation2 + $0x80] sm:$0xff] 0.0
      %46 = vst [vmem:[#allocation2 + $0x88] sm:$0xff] 0.0
      %47 = vst [vmem:[#allocation2 + $0x90] sm:$0xff] 0.0
      %48 = vst [vmem:[#allocation2 + $0x98] sm:$0xff] 0.0
      %49 = vst [vmem:[#allocation2 + $0xa0] sm:$0xff] 0.0
      %50 = vst [vmem:[#allocation2 + $0xa8] sm:$0xff] 0.0
      %51 = vst [vmem:[#allocation2 + $0xb0] sm:$0xff] 0.0
      %52 = vst [vmem:[#allocation2 + $0xb8] sm:$0xff] 0.0
      %53 = vst [vmem:[#allocation2 + $0xc0] sm:$0xff] 0.0
      %54 = vst [vmem:[#allocation2 + $0xc8] sm:$0xff] 0.0
      %55 = vst [vmem:[#allocation2 + $0xd0] sm:$0xff] 0.0
      %56 = vst [vmem:[#allocation2 + $0xd8] sm:$0xff] 0.0
      %57 = vst [vmem:[#allocation2 + $0xe0] sm:$0xff] 0.0
      %58 = vst [vmem:[#allocation2 + $0xe8] sm:$0xff] 0.0
      %59 = vst [vmem:[#allocation2 + $0xf0] sm:$0xff] 0.0
      %60 = vst [vmem:[#allocation2 + $0xf8] sm:$0xff] 0.0
    $region29: #{tpu_custom_call.1} parent=1 // pred_fallthru
      _
    %s61 = smul.u32 0, 256
    %s62 = sshra.s32 %s61, 3
    %s63 = sand.u32 %s61, 7
    %s64 = smul.addr %s62, 4
    %s65 = scalar_lea.vmem %s1, %s64
    %v66 = vld [vmem:[%s65] sm:$0xf]
    %v67 = vld [vmem:[%s65 + $0x4] sm:$0xf]
    %v68 = vld [vmem:[%s65 + $0x8] sm:$0xf]
    %v69 = vld [vmem:[%s65 + $0xc] sm:$0xf]
    %v70 = vld [vmem:[%s65 + $0x10] sm:$0xf]
    %v71 = vld [vmem:[%s65 + $0x14] sm:$0xf]
    %v72 = vld [vmem:[%s65 + $0x18] sm:$0xf]
    %v73 = vld [vmem:[%s65 + $0x1c] sm:$0xf]
    %v74 = vld [vmem:[%s65 + $0x20] sm:$0xf]
    %v75 = vld [vmem:[%s65 + $0x24] sm:$0xf]
    %v76 = vld [vmem:[%s65 + $0x28] sm:$0xf]
    %v77 = vld [vmem:[%s65 + $0x2c] sm:$0xf]
    %v78 = vld [vmem:[%s65 + $0x30] sm:$0xf]
    %v79 = vld [vmem:[%s65 + $0x34] sm:$0xf]
    %v80 = vld [vmem:[%s65 + $0x38] sm:$0xf]
    %v81 = vld [vmem:[%s65 + $0x3c] sm:$0xf]
    %v82 = vld [vmem:[%s65 + $0x40] sm:$0xf]
    %v83 = vld [vmem:[%s65 + $0x44] sm:$0xf]
    %v84 = vld [vmem:[%s65 + $0x48] sm:$0xf]
    %v85 = vld [vmem:[%s65 + $0x4c] sm:$0xf]
    %v86 = vld [vmem:[%s65 + $0x50] sm:$0xf]
    %v87 = vld [vmem:[%s65 + $0x54] sm:$0xf]
    %v88 = vld [vmem:[%s65 + $0x58] sm:$0xf]
    %v89 = vld [vmem:[%s65 + $0x5c] sm:$0xf]
    %v90 = vld [vmem:[%s65 + $0x60] sm:$0xf]
    %v91 = vld [vmem:[%s65 + $0x64] sm:$0xf]
    %v92 = vld [vmem:[%s65 + $0x68] sm:$0xf]
    %v93 = vld [vmem:[%s65 + $0x6c] sm:$0xf]
    %v94 = vld [vmem:[%s65 + $0x70] sm:$0xf]
    %v95 = vld [vmem:[%s65 + $0x74] sm:$0xf]
    %v96 = vld [vmem:[%s65 + $0x78] sm:$0xf]
    %v97 = vld [vmem:[%s65 + $0x7c] sm:$0xf]
    %v98 = vld [vmem:[%s2] sm:$0xf]
    %v99 = vld [vmem:[%s2 + $0x4] sm:$0xf]
    %v100 = vld [vmem:[%s2 + $0x8] sm:$0xf]
    %v101 = vld [vmem:[%s2 + $0xc] sm:$0xf]
    %v102 = vld [vmem:[%s2 + $0x10] sm:$0xf]
    %v103 = vld [vmem:[%s2 + $0x14] sm:$0xf]
    %v104 = vld [vmem:[%s2 + $0x18] sm:$0xf]
    %v105 = vld [vmem:[%s2 + $0x1c] sm:$0xf]
    %v106 = vld [vmem:[%s2 + $0x20] sm:$0xf]
    %v107 = vld [vmem:[%s2 + $0x24] sm:$0xf]
    %v108 = vld [vmem:[%s2 + $0x28] sm:$0xf]
    %v109 = vld [vmem:[%s2 + $0x2c] sm:$0xf]
    %v110 = vld [vmem:[%s2 + $0x30] sm:$0xf]
    %v111 = vld [vmem:[%s2 + $0x34] sm:$0xf]
    %v112 = vld [vmem:[%s2 + $0x38] sm:$0xf]
    %v113 = vld [vmem:[%s2 + $0x3c] sm:$0xf]
    %v146 = vunpack.c.l.b16 %v66
    %v147 = vunpack.c.l.b16 %v67
    %v148 = vunpack.c.l.b16 %v68
    %v149 = vunpack.c.l.b16 %v69
    %v150 = vunpack.c.l.b16 %v70
    %v151 = vunpack.c.l.b16 %v71
    %v152 = vunpack.c.l.b16 %v72
    %v153 = vunpack.c.l.b16 %v73
    %v154 = vunpack.c.l.b16 %v74
    %v155 = vunpack.c.l.b16 %v75
    %v156 = vunpack.c.l.b16 %v76
    %v157 = vunpack.c.l.b16 %v77
    %v158 = vunpack.c.l.b16 %v78
    %v159 = vunpack.c.l.b16 %v79
    %v160 = vunpack.c.l.b16 %v80
    %v161 = vunpack.c.l.b16 %v81
    %v162 = vunpack.c.l.b16 %v82
    %v163 = vunpack.c.l.b16 %v83
    %v164 = vunpack.c.l.b16 %v84
    %v165 = vunpack.c.l.b16 %v85
    %v166 = vunpack.c.l.b16 %v86
    %v167 = vunpack.c.l.b16 %v87
    %v168 = vunpack.c.l.b16 %v88
    %v169 = vunpack.c.l.b16 %v89
    %v170 = vunpack.c.l.b16 %v90
    %v171 = vunpack.c.l.b16 %v91
    %v172 = vunpack.c.l.b16 %v92
    %v173 = vunpack.c.l.b16 %v93
    %v174 = vunpack.c.l.b16 %v94
    %v175 = vunpack.c.l.b16 %v95
    %v176 = vunpack.c.l.b16 %v96
    %v177 = vunpack.c.l.b16 %v97
    %v178 = vpack.c.b16 %v147, %v146
    %v179 = vpack.c.b16 %v149, %v148
    %v180 = vpack.c.b16 %v151, %v150
    %v181 = vpack.c.b16 %v153, %v152
    %v182 = vpack.c.b16 %v155, %v154
    %v183 = vpack.c.b16 %v157, %v156
    %v184 = vpack.c.b16 %v159, %v158
    %v185 = vpack.c.b16 %v161, %v160
    %v186 = vpack.c.b16 %v163, %v162
    %v187 = vpack.c.b16 %v165, %v164
    %v188 = vpack.c.b16 %v167, %v166
    %v189 = vpack.c.b16 %v169, %v168
    %v190 = vpack.c.b16 %v171, %v170
    %v191 = vpack.c.b16 %v173, %v172
    %v192 = vpack.c.b16 %v175, %v174
    %v193 = vpack.c.b16 %v177, %v176
    %v226 = vunpack.c.l.b16 %v98
    %v227 = vunpack.c.l.b16 %v99
    %v228 = vunpack.c.l.b16 %v100
    %v229 = vunpack.c.l.b16 %v101
    %v230 = vunpack.c.l.b16 %v102
    %v231 = vunpack.c.l.b16 %v103
    %v232 = vunpack.c.l.b16 %v104
    %v233 = vunpack.c.l.b16 %v105
    %v234 = vunpack.c.l.b16 %v106
    %v235 = vunpack.c.l.b16 %v107
    %v236 = vunpack.c.l.b16 %v108
    %v237 = vunpack.c.l.b16 %v109
    %v238 = vunpack.c.l.b16 %v110
    %v239 = vunpack.c.l.b16 %v111
    %v240 = vunpack.c.l.b16 %v112
    %v241 = vunpack.c.l.b16 %v113
    %v242 = vpack.c.b16 %v227, %v226
    %v243 = vpack.c.b16 %v229, %v228
    %v244 = vpack.c.b16 %v231, %v230
    %v245 = vpack.c.b16 %v233, %v232
    %v246 = vpack.c.b16 %v235, %v234
    %v247 = vpack.c.b16 %v237, %v236
    %v248 = vpack.c.b16 %v239, %v238
    %v249 = vpack.c.b16 %v241, %v240
    %258 = vmatprep.subr.bf16.mxu0 0
    %259 = vmatpush1.bf16.msra.mxu0 %v249
    %260 = vmatprep.subr.bf16.mxu0 0
    %261 = vmatpush1.bf16.msra.mxu0 %v248
    %262 = vmatprep.subr.bf16.mxu0 0
    %263 = vmatpush1.bf16.msra.mxu0 %v247
    %264 = vmatprep.subr.bf16.mxu0 0
    %265 = vmatpush1.bf16.msra.mxu0 %v246
    %266 = vmatprep.subr.bf16.mxu0 0
    %267 = vmatpush1.bf16.msra.mxu0 %v245
    %268 = vmatprep.subr.bf16.mxu0 0
    %269 = vmatpush1.bf16.msra.mxu0 %v244
    %270 = vmatprep.subr.bf16.mxu0 0
    %271 = vmatpush1.bf16.msra.mxu0 %v243
    %272 = vmatprep.subr.bf16.mxu0 0
    %273 = vmatpush1.bf16.msra.mxu0 %v242
    %274 = vmatprep.subr.bf16.mxu0 0
    %275 = vmatpush2.bf16.msra.mxu0 0
    %276 = vmatprep.subr.bf16.mxu0 0
    %277 = vmatpush2.bf16.msra.mxu0 0
    %278 = vmatprep.subr.bf16.mxu0 0
    %279 = vmatpush2.bf16.msra.mxu0 0
    %280 = vmatprep.subr.bf16.mxu0 0
    %281 = vmatpush2.bf16.msra.mxu0 0
    %282 = vmatprep.subr.bf16.mxu0 0
    %283 = vmatpush2.bf16.msra.mxu0 0
    %284 = vmatprep.subr.bf16.mxu0 0
    %285 = vmatpush2.bf16.msra.mxu0 0
    %286 = vmatprep.subr.bf16.mxu0 0
    %287 = vmatpush2.bf16.msra.mxu0 0
    %288 = vmatprep.subr.bf16.mxu0 0
    %289 = vmatpush2.bf16.msra.mxu0 0
    %290 = vmatprep.mubr.bf16.mxu0 0
    %291 = vmatmul.mubr.bf16.gmra.mxu0 %v178
    %v292 = vpop.f32.mrf.mxu0
    %v293 = vadd.f32 0.0, %v292
    %v294 = vpop.f32.mrf.mxu0
    %v295 = vpop.f32.mrf.mxu0
    %v296 = vadd.f32 0.0, %v295
    %v297 = vpop.f32.mrf.mxu0
    %298 = vmatprep.mubr.bf16.mxu0 0
    %299 = vmatmul.mubr.bf16.gmra.mxu0 %v179
    %v300 = vpop.f32.mrf.mxu0
    %v301 = vadd.f32 0.0, %v300
    %v302 = vpop.f32.mrf.mxu0
    %v303 = vpop.f32.mrf.mxu0
    %v304 = vadd.f32 0.0, %v303
    %v305 = vpop.f32.mrf.mxu0
    %306 = vmatprep.mubr.bf16.mxu0 0
    %307 = vmatmul.mubr.bf16.gmra.mxu0 %v180
    %v308 = vpop.f32.mrf.mxu0
    %v309 = vadd.f32 0.0, %v308
    %v310 = vpop.f32.mrf.mxu0
    %v311 = vpop.f32.mrf.mxu0
    %v312 = vadd.f32 0.0, %v311
    %v313 = vpop.f32.mrf.mxu0
    %314 = vmatprep.mubr.bf16.mxu0 0
    %315 = vmatmul.mubr.bf16.gmra.mxu0 %v181
    %v316 = vpop.f32.mrf.mxu0
    %v317 = vadd.f32 0.0, %v316
    %v318 = vpop.f32.mrf.mxu0
    %v319 = vpop.f32.mrf.mxu0
    %v320 = vadd.f32 0.0, %v319
    %v321 = vpop.f32.mrf.mxu0
    %322 = vmatprep.mubr.bf16.mxu0 0
    %323 = vmatmul.mubr.bf16.gmra.mxu0 %v182
    %v324 = vpop.f32.mrf.mxu0
    %v325 = vadd.f32 0.0, %v324
    %v326 = vpop.f32.mrf.mxu0
    %v327 = vpop.f32.mrf.mxu0
    %v328 = vadd.f32 0.0, %v327
    %v329 = vpop.f32.mrf.mxu0
    %330 = vmatprep.mubr.bf16.mxu0 0
    %331 = vmatmul.mubr.bf16.gmra.mxu0 %v183
    %v332 = vpop.f32.mrf.mxu0
    %v333 = vadd.f32 0.0, %v332
    %v334 = vpop.f32.mrf.mxu0
    %v335 = vpop.f32.mrf.mxu0
    %v336 = vadd.f32 0.0, %v335
    %v337 = vpop.f32.mrf.mxu0
    %338 = vmatprep.mubr.bf16.mxu0 0
    %339 = vmatmul.mubr.bf16.gmra.mxu0 %v184
    %v340 = vpop.f32.mrf.mxu0
    %v341 = vadd.f32 0.0, %v340
    %v342 = vpop.f32.mrf.mxu0
    %v343 = vpop.f32.mrf.mxu0
    %v344 = vadd.f32 0.0, %v343
    %v345 = vpop.f32.mrf.mxu0
    %346 = vmatprep.mubr.bf16.mxu0 0
    %347 = vmatmul.mubr.bf16.gmra.mxu0 %v185
    %v348 = vpop.f32.mrf.mxu0
    %v349 = vadd.f32 0.0, %v348
    %v350 = vpop.f32.mrf.mxu0
    %v351 = vpop.f32.mrf.mxu0
    %v352 = vadd.f32 0.0, %v351
    %v353 = vpop.f32.mrf.mxu0
    %354 = vmatprep.mubr.bf16.mxu0 0
    %355 = vmatmul.mubr.bf16.gmra.mxu0 %v186
    %v356 = vpop.f32.mrf.mxu0
    %v357 = vadd.f32 0.0, %v356
    %v358 = vpop.f32.mrf.mxu0
    %v359 = vpop.f32.mrf.mxu0
    %v360 = vadd.f32 0.0, %v359
    %v361 = vpop.f32.mrf.mxu0
    %362 = vmatprep.mubr.bf16.mxu0 0
    %363 = vmatmul.mubr.bf16.gmra.mxu0 %v187
    %v364 = vpop.f32.mrf.mxu0
    %v365 = vadd.f32 0.0, %v364
    %v366 = vpop.f32.mrf.mxu0
    %v367 = vpop.f32.mrf.mxu0
    %v368 = vadd.f32 0.0, %v367
    %v369 = vpop.f32.mrf.mxu0
    %370 = vmatprep.mubr.bf16.mxu0 0
    %371 = vmatmul.mubr.bf16.gmra.mxu0 %v188
    %v372 = vpop.f32.mrf.mxu0
    %v373 = vadd.f32 0.0, %v372
    %v374 = vpop.f32.mrf.mxu0
    %v375 = vpop.f32.mrf.mxu0
    %v376 = vadd.f32 0.0, %v375
    %v377 = vpop.f32.mrf.mxu0
    %378 = vmatprep.mubr.bf16.mxu0 0
    %379 = vmatmul.mubr.bf16.gmra.mxu0 %v189
    %v380 = vpop.f32.mrf.mxu0
    %v381 = vadd.f32 0.0, %v380
    %v382 = vpop.f32.mrf.mxu0
    %v383 = vpop.f32.mrf.mxu0
    %v384 = vadd.f32 0.0, %v383
    %v385 = vpop.f32.mrf.mxu0
    %386 = vmatprep.mubr.bf16.mxu0 0
    %387 = vmatmul.mubr.bf16.gmra.mxu0 %v190
    %v388 = vpop.f32.mrf.mxu0
    %v389 = vadd.f32 0.0, %v388
    %v390 = vpop.f32.mrf.mxu0
    %v391 = vpop.f32.mrf.mxu0
    %v392 = vadd.f32 0.0, %v391
    %v393 = vpop.f32.mrf.mxu0
    %394 = vmatprep.mubr.bf16.mxu0 0
    %395 = vmatmul.mubr.bf16.gmra.mxu0 %v191
    %v396 = vpop.f32.mrf.mxu0
    %v397 = vadd.f32 0.0, %v396
    %v398 = vpop.f32.mrf.mxu0
    %v399 = vpop.f32.mrf.mxu0
    %v400 = vadd.f32 0.0, %v399
    %v401 = vpop.f32.mrf.mxu0
    %402 = vmatprep.mubr.bf16.mxu0 0
    %403 = vmatmul.mubr.bf16.gmra.mxu0 %v192
    %v404 = vpop.f32.mrf.mxu0
    %v405 = vadd.f32 0.0, %v404
    %v406 = vpop.f32.mrf.mxu0
    %v407 = vpop.f32.mrf.mxu0
    %v408 = vadd.f32 0.0, %v407
    %v409 = vpop.f32.mrf.mxu0
    %410 = vmatprep.mubr.bf16.mxu0 0
    %411 = vmatmul.mubr.bf16.gmra.mxu0 %v193
    %v412 = vpop.f32.mrf.mxu0
    %v413 = vadd.f32 0.0, %v412
    %v414 = vpop.f32.mrf.mxu0
    %v415 = vpop.f32.mrf.mxu0
    %v416 = vadd.f32 0.0, %v415
    %v417 = vpop.f32.mrf.mxu0
    %418 = vdwg.mxu0
    %v419 = vld [vmem:[%s4] sm:$0xff]
    %v420 = vld [vmem:[%s4 + $0x8] sm:$0xff]
    %v421 = vld [vmem:[%s4 + $0x10] sm:$0xff]
    %v422 = vld [vmem:[%s4 + $0x18] sm:$0xff]
    %v423 = vld [vmem:[%s4 + $0x20] sm:$0xff]
    %v424 = vld [vmem:[%s4 + $0x28] sm:$0xff]
    %v425 = vld [vmem:[%s4 + $0x30] sm:$0xff]
    %v426 = vld [vmem:[%s4 + $0x38] sm:$0xff]
    %v427 = vld [vmem:[%s4 + $0x40] sm:$0xff]
    %v428 = vld [vmem:[%s4 + $0x48] sm:$0xff]
    %v429 = vld [vmem:[%s4 + $0x50] sm:$0xff]
    %v430 = vld [vmem:[%s4 + $0x58] sm:$0xff]
    %v431 = vld [vmem:[%s4 + $0x60] sm:$0xff]
    %v432 = vld [vmem:[%s4 + $0x68] sm:$0xff]
    %v433 = vld [vmem:[%s4 + $0x70] sm:$0xff]
    %v434 = vld [vmem:[%s4 + $0x78] sm:$0xff]
    %v435 = vld [vmem:[%s4 + $0x80] sm:$0xff]
    %v436 = vld [vmem:[%s4 + $0x88] sm:$0xff]
    %v437 = vld [vmem:[%s4 + $0x90] sm:$0xff]
    %v438 = vld [vmem:[%s4 + $0x98] sm:$0xff]
    %v439 = vld [vmem:[%s4 + $0xa0] sm:$0xff]
    %v440 = vld [vmem:[%s4 + $0xa8] sm:$0xff]
    %v441 = vld [vmem:[%s4 + $0xb0] sm:$0xff]
    %v442 = vld [vmem:[%s4 + $0xb8] sm:$0xff]
    %v443 = vld [vmem:[%s4 + $0xc0] sm:$0xff]
    %v444 = vld [vmem:[%s4 + $0xc8] sm:$0xff]
    %v445 = vld [vmem:[%s4 + $0xd0] sm:$0xff]
    %v446 = vld [vmem:[%s4 + $0xd8] sm:$0xff]
    %v447 = vld [vmem:[%s4 + $0xe0] sm:$0xff]
    %v448 = vld [vmem:[%s4 + $0xe8] sm:$0xff]
    %v449 = vld [vmem:[%s4 + $0xf0] sm:$0xff]
    %v450 = vld [vmem:[%s4 + $0xf8] sm:$0xff]
    %452 = vset.pattern.permute.xlu0 0
    %453 = vperm.xlu0 %452, %v419
    %v454 = vpop.permute.xlu0 %453
    %457 = vset.pattern.permute.xlu0 0
    %458 = vperm.xlu0 %457, %v420
    %v459 = vpop.permute.xlu0 %458
    %462 = vset.pattern.permute.xlu0 0
    %463 = vperm.xlu0 %462, %v421
    %v464 = vpop.permute.xlu0 %463
    %467 = vset.pattern.permute.xlu0 0
    %468 = vperm.xlu0 %467, %v422
    %v469 = vpop.permute.xlu0 %468
    %472 = vset.pattern.permute.xlu0 0
    %473 = vperm.xlu0 %472, %v423
    %v474 = vpop.permute.xlu0 %473
    %477 = vset.pattern.permute.xlu0 0
    %478 = vperm.xlu0 %477, %v424
    %v479 = vpop.permute.xlu0 %478
    %482 = vset.pattern.permute.xlu0 0
    %483 = vperm.xlu0 %482, %v425
    %v484 = vpop.permute.xlu0 %483
    %487 = vset.pattern.permute.xlu0 0
    %488 = vperm.xlu0 %487, %v426
    %v489 = vpop.permute.xlu0 %488
    %492 = vset.pattern.permute.xlu0 0
    %493 = vperm.xlu0 %492, %v427
    %v494 = vpop.permute.xlu0 %493
    %497 = vset.pattern.permute.xlu0 0
    %498 = vperm.xlu0 %497, %v428
    %v499 = vpop.permute.xlu0 %498
    %502 = vset.pattern.permute.xlu0 0
    %503 = vperm.xlu0 %502, %v429
    %v504 = vpop.permute.xlu0 %503
    %507 = vset.pattern.permute.xlu0 0
    %508 = vperm.xlu0 %507, %v430
    %v509 = vpop.permute.xlu0 %508
    %512 = vset.pattern.permute.xlu0 0
    %513 = vperm.xlu0 %512, %v431
    %v514 = vpop.permute.xlu0 %513
    %517 = vset.pattern.permute.xlu0 0
    %518 = vperm.xlu0 %517, %v432
    %v519 = vpop.permute.xlu0 %518
    %522 = vset.pattern.permute.xlu0 0
    %523 = vperm.xlu0 %522, %v433
    %v524 = vpop.permute.xlu0 %523
    %527 = vset.pattern.permute.xlu0 0
    %528 = vperm.xlu0 %527, %v434
    %v529 = vpop.permute.xlu0 %528
    %532 = vset.pattern.permute.xlu0 0
    %533 = vperm.xlu0 %532, %v435
    %v534 = vpop.permute.xlu0 %533
    %537 = vset.pattern.permute.xlu0 0
    %538 = vperm.xlu0 %537, %v436
    %v539 = vpop.permute.xlu0 %538
    %542 = vset.pattern.permute.xlu0 0
    %543 = vperm.xlu0 %542, %v437
    %v544 = vpop.permute.xlu0 %543
    %547 = vset.pattern.permute.xlu0 0
    %548 = vperm.xlu0 %547, %v438
    %v549 = vpop.permute.xlu0 %548
    %552 = vset.pattern.permute.xlu0 0
    %553 = vperm.xlu0 %552, %v439
    %v554 = vpop.permute.xlu0 %553
    %557 = vset.pattern.permute.xlu0 0
    %558 = vperm.xlu0 %557, %v440
    %v559 = vpop.permute.xlu0 %558
    %562 = vset.pattern.permute.xlu0 0
    %563 = vperm.xlu0 %562, %v441
    %v564 = vpop.permute.xlu0 %563
    %567 = vset.pattern.permute.xlu0 0
    %568 = vperm.xlu0 %567, %v442
    %v569 = vpop.permute.xlu0 %568
    %572 = vset.pattern.permute.xlu0 0
    %573 = vperm.xlu0 %572, %v443
    %v574 = vpop.permute.xlu0 %573
    %577 = vset.pattern.permute.xlu0 0
    %578 = vperm.xlu0 %577, %v444
    %v579 = vpop.permute.xlu0 %578
    %582 = vset.pattern.permute.xlu0 0
    %583 = vperm.xlu0 %582, %v445
    %v584 = vpop.permute.xlu0 %583
    %587 = vset.pattern.permute.xlu0 0
    %588 = vperm.xlu0 %587, %v446
    %v589 = vpop.permute.xlu0 %588
    %592 = vset.pattern.permute.xlu0 0
    %593 = vperm.xlu0 %592, %v447
    %v594 = vpop.permute.xlu0 %593
    %597 = vset.pattern.permute.xlu0 0
    %598 = vperm.xlu0 %597, %v448
    %v599 = vpop.permute.xlu0 %598
    %602 = vset.pattern.permute.xlu0 0
    %603 = vperm.xlu0 %602, %v449
    %v604 = vpop.permute.xlu0 %603
    %607 = vset.pattern.permute.xlu0 0
    %608 = vperm.xlu0 %607, %v450
    %v609 = vpop.permute.xlu0 %608
    %v611 = vmul.f32 %v293, %v454
    %v612 = vmul.f32 %v296, %v459
    %v613 = vmul.f32 %v301, %v464
    %v614 = vmul.f32 %v304, %v469
    %v615 = vmul.f32 %v309, %v474
    %v616 = vmul.f32 %v312, %v479
    %v617 = vmul.f32 %v317, %v484
    %v618 = vmul.f32 %v320, %v489
    %v619 = vmul.f32 %v325, %v494
    %v620 = vmul.f32 %v328, %v499
    %v621 = vmul.f32 %v333, %v504
    %v622 = vmul.f32 %v336, %v509
    %v623 = vmul.f32 %v341, %v514
    %v624 = vmul.f32 %v344, %v519
    %v625 = vmul.f32 %v349, %v524
    %v626 = vmul.f32 %v352, %v529
    %v627 = vmul.f32 %v357, %v534
    %v628 = vmul.f32 %v360, %v539
    %v629 = vmul.f32 %v365, %v544
    %v630 = vmul.f32 %v368, %v549
    %v631 = vmul.f32 %v373, %v554
    %v632 = vmul.f32 %v376, %v559
    %v633 = vmul.f32 %v381, %v564
    %v634 = vmul.f32 %v384, %v569
    %v635 = vmul.f32 %v389, %v574
    %v636 = vmul.f32 %v392, %v579
    %v637 = vmul.f32 %v397, %v584
    %v638 = vmul.f32 %v400, %v589
    %v639 = vmul.f32 %v405, %v594
    %v640 = vmul.f32 %v408, %v599
    %v641 = vmul.f32 %v413, %v604
    %v642 = vmul.f32 %v416, %v609
    %v643 = vld [vmem:[%s0] sm:$0xff]
    %v644 = vld [vmem:[%s0 + $0x8] sm:$0xff]
    %v645 = vld [vmem:[%s0 + $0x10] sm:$0xff]
    %v646 = vld [vmem:[%s0 + $0x18] sm:$0xff]
    %v647 = vld [vmem:[%s0 + $0x20] sm:$0xff]
    %v648 = vld [vmem:[%s0 + $0x28] sm:$0xff]
    %v649 = vld [vmem:[%s0 + $0x30] sm:$0xff]
    %v650 = vld [vmem:[%s0 + $0x38] sm:$0xff]
    %v651 = vld [vmem:[%s0 + $0x40] sm:$0xff]
    %v652 = vld [vmem:[%s0 + $0x48] sm:$0xff]
    %v653 = vld [vmem:[%s0 + $0x50] sm:$0xff]
    %v654 = vld [vmem:[%s0 + $0x58] sm:$0xff]
    %v655 = vld [vmem:[%s0 + $0x60] sm:$0xff]
    %v656 = vld [vmem:[%s0 + $0x68] sm:$0xff]
    %v657 = vld [vmem:[%s0 + $0x70] sm:$0xff]
    %v658 = vld [vmem:[%s0 + $0x78] sm:$0xff]
    %v659 = vunpack.c.l.s8.bf16 %v643
    %v660 = vunpack.c.l.s8.bf16 %v644
    %v661 = vunpack.c.h.s8.bf16 %v643
    %v662 = vunpack.c.h.s8.bf16 %v644
    %v663 = vunpack.c.l.s8.bf16 %v645
    %v664 = vunpack.c.l.s8.bf16 %v646
    %v665 = vunpack.c.h.s8.bf16 %v645
    %v666 = vunpack.c.h.s8.bf16 %v646
    %v667 = vunpack.c.l.s8.bf16 %v647
    %v668 = vunpack.c.l.s8.bf16 %v648
    %v669 = vunpack.c.h.s8.bf16 %v647
    %v670 = vunpack.c.h.s8.bf16 %v648
    %v671 = vunpack.c.l.s8.bf16 %v649
    %v672 = vunpack.c.l.s8.bf16 %v650
    %v673 = vunpack.c.h.s8.bf16 %v649
    %v674 = vunpack.c.h.s8.bf16 %v650
    %v675 = vunpack.c.l.s8.bf16 %v651
    %v676 = vunpack.c.l.s8.bf16 %v652
    %v677 = vunpack.c.h.s8.bf16 %v651
    %v678 = vunpack.c.h.s8.bf16 %v652
    %v679 = vunpack.c.l.s8.bf16 %v653
    %v680 = vunpack.c.l.s8.bf16 %v654
    %v681 = vunpack.c.h.s8.bf16 %v653
    %v682 = vunpack.c.h.s8.bf16 %v654
    %v683 = vunpack.c.l.s8.bf16 %v655
    %v684 = vunpack.c.l.s8.bf16 %v656
    %v685 = vunpack.c.h.s8.bf16 %v655
    %v686 = vunpack.c.h.s8.bf16 %v656
    %v687 = vunpack.c.l.s8.bf16 %v657
    %v688 = vunpack.c.l.s8.bf16 %v658
    %v689 = vunpack.c.h.s8.bf16 %v657
    %v690 = vunpack.c.h.s8.bf16 %v658
    %v691 = vld [vmem:[#allocation2] sm:$0xff]
    %v692 = vld [vmem:[#allocation2 + $0x8] sm:$0xff]
    %v693 = vld [vmem:[#allocation2 + $0x10] sm:$0xff]
    %v694 = vld [vmem:[#allocation2 + $0x18] sm:$0xff]
    %v695 = vld [vmem:[#allocation2 + $0x20] sm:$0xff]
    %v696 = vld [vmem:[#allocation2 + $0x28] sm:$0xff]
    %v697 = vld [vmem:[#allocation2 + $0x30] sm:$0xff]
    %v698 = vld [vmem:[#allocation2 + $0x38] sm:$0xff]
    %v699 = vld [vmem:[#allocation2 + $0x40] sm:$0xff]
    %v700 = vld [vmem:[#allocation2 + $0x48] sm:$0xff]
    %v701 = vld [vmem:[#allocation2 + $0x50] sm:$0xff]
    %v702 = vld [vmem:[#allocation2 + $0x58] sm:$0xff]
    %v703 = vld [vmem:[#allocation2 + $0x60] sm:$0xff]
    %v704 = vld [vmem:[#allocation2 + $0x68] sm:$0xff]
    %v705 = vld [vmem:[#allocation2 + $0x70] sm:$0xff]
    %v706 = vld [vmem:[#allocation2 + $0x78] sm:$0xff]
    %v707 = vld [vmem:[#allocation2 + $0x80] sm:$0xff]
    %v708 = vld [vmem:[#allocation2 + $0x88] sm:$0xff]
    %v709 = vld [vmem:[#allocation2 + $0x90] sm:$0xff]
    %v710 = vld [vmem:[#allocation2 + $0x98] sm:$0xff]
    %v711 = vld [vmem:[#allocation2 + $0xa0] sm:$0xff]
    %v712 = vld [vmem:[#allocation2 + $0xa8] sm:$0xff]
    %v713 = vld [vmem:[#allocation2 + $0xb0] sm:$0xff]
    %v714 = vld [vmem:[#allocation2 + $0xb8] sm:$0xff]
    %v715 = vld [vmem:[#allocation2 + $0xc0] sm:$0xff]
    %v716 = vld [vmem:[#allocation2 + $0xc8] sm:$0xff]
    %v717 = vld [vmem:[#allocation2 + $0xd0] sm:$0xff]
    %v718 = vld [vmem:[#allocation2 + $0xd8] sm:$0xff]
    %v719 = vld [vmem:[#allocation2 + $0xe0] sm:$0xff]
    %v720 = vld [vmem:[#allocation2 + $0xe8] sm:$0xff]
    %v721 = vld [vmem:[#allocation2 + $0xf0] sm:$0xff]
    %v722 = vld [vmem:[#allocation2 + $0xf8] sm:$0xff]
    %v723 = vpack.c.bf16 %v612, %v611
    %v724 = vpack.c.bf16 %v614, %v613
    %v725 = vpack.c.bf16 %v616, %v615
    %v726 = vpack.c.bf16 %v618, %v617
    %v727 = vpack.c.bf16 %v620, %v619
    %v728 = vpack.c.bf16 %v622, %v621
    %v729 = vpack.c.bf16 %v624, %v623
    %v730 = vpack.c.bf16 %v626, %v625
    %v731 = vpack.c.bf16 %v628, %v627
    %v732 = vpack.c.bf16 %v630, %v629
    %v733 = vpack.c.bf16 %v632, %v631
    %v734 = vpack.c.bf16 %v634, %v633
    %v735 = vpack.c.bf16 %v636, %v635
    %v736 = vpack.c.bf16 %v638, %v637
    %v737 = vpack.c.bf16 %v640, %v639
    %v738 = vpack.c.bf16 %v642, %v641
    %739 = vmatprep.subr.bf16.mxu0 0
    %740 = vmatpush1.bf16.msra.mxu0 %v730
    %741 = vmatprep.subr.bf16.mxu0 0
    %742 = vmatpush1.bf16.msra.mxu0 %v729
    %743 = vmatprep.subr.bf16.mxu0 0
    %744 = vmatpush1.bf16.msra.mxu0 %v728
    %745 = vmatprep.subr.bf16.mxu0 0
    %746 = vmatpush1.bf16.msra.mxu0 %v727
    %747 = vmatprep.subr.bf16.mxu0 0
    %748 = vmatpush1.bf16.msra.mxu0 %v726
    %749 = vmatprep.subr.bf16.mxu0 0
    %750 = vmatpush1.bf16.msra.mxu0 %v725
    %751 = vmatprep.subr.bf16.mxu0 0
    %752 = vmatpush1.bf16.msra.mxu0 %v724
    %753 = vmatprep.subr.bf16.mxu0 0
    %754 = vmatpush1.bf16.msra.mxu0 %v723
    %755 = vmatprep.subr.bf16.mxu0 0
    %756 = vmatpush2.bf16.msra.mxu0 %v738
    %757 = vmatprep.subr.bf16.mxu0 0
    %758 = vmatpush2.bf16.msra.mxu0 %v737
    %759 = vmatprep.subr.bf16.mxu0 0
    %760 = vmatpush2.bf16.msra.mxu0 %v736
    %761 = vmatprep.subr.bf16.mxu0 0
    %762 = vmatpush2.bf16.msra.mxu0 %v735
    %763 = vmatprep.subr.bf16.mxu0 0
    %764 = vmatpush2.bf16.msra.mxu0 %v734
    %765 = vmatprep.subr.bf16.mxu0 0
    %766 = vmatpush2.bf16.msra.mxu0 %v733
    %767 = vmatprep.subr.bf16.mxu0 0
    %768 = vmatpush2.bf16.msra.mxu0 %v732
    %769 = vmatprep.subr.bf16.mxu0 0
    %770 = vmatpush2.bf16.msra.mxu0 %v731
    %771 = vmatprep.mubr.bf16.mxu0 %v660
    %772 = vmatmul.mubr.bf16.gmra.mxu0 %v659
    %v773 = vpop.f32.mrf.mxu0
    %v774 = vadd.f32 0.0, %v773
    %v775 = vpop.f32.mrf.mxu0
    %v776 = vpop.f32.mrf.mxu0
    %v777 = vadd.f32 0.0, %v776
    %v778 = vpop.f32.mrf.mxu0
    %779 = vmatprep.mubr.bf16.mxu0 %v662
    %780 = vmatmul.mubr.bf16.gmra.mxu0 %v661
    %v781 = vpop.f32.mrf.mxu0
    %v782 = vadd.f32 0.0, %v781
    %v783 = vpop.f32.mrf.mxu0
    %v784 = vpop.f32.mrf.mxu0
    %v785 = vadd.f32 0.0, %v784
    %v786 = vpop.f32.mrf.mxu0
    %787 = vmatprep.mubr.bf16.mxu0 %v664
    %788 = vmatmul.mubr.bf16.gmra.mxu0 %v663
    %v789 = vpop.f32.mrf.mxu0
    %v790 = vadd.f32 0.0, %v789
    %v791 = vpop.f32.mrf.mxu0
    %v792 = vpop.f32.mrf.mxu0
    %v793 = vadd.f32 0.0, %v792
    %v794 = vpop.f32.mrf.mxu0
    %795 = vmatprep.mubr.bf16.mxu0 %v666
    %796 = vmatmul.mubr.bf16.gmra.mxu0 %v665
    %v797 = vpop.f32.mrf.mxu0
    %v798 = vadd.f32 0.0, %v797
    %v799 = vpop.f32.mrf.mxu0
    %v800 = vpop.f32.mrf.mxu0
    %v801 = vadd.f32 0.0, %v800
    %v802 = vpop.f32.mrf.mxu0
    %803 = vmatprep.mubr.bf16.mxu0 %v668
    %804 = vmatmul.mubr.bf16.gmra.mxu0 %v667
    %v805 = vpop.f32.mrf.mxu0
    %v806 = vadd.f32 0.0, %v805
    %v807 = vpop.f32.mrf.mxu0
    %v808 = vpop.f32.mrf.mxu0
    %v809 = vadd.f32 0.0, %v808
    %v810 = vpop.f32.mrf.mxu0
    %811 = vmatprep.mubr.bf16.mxu0 %v670
    %812 = vmatmul.mubr.bf16.gmra.mxu0 %v669
    %v813 = vpop.f32.mrf.mxu0
    %v814 = vadd.f32 0.0, %v813
    %v815 = vpop.f32.mrf.mxu0
    %v816 = vpop.f32.mrf.mxu0
    %v817 = vadd.f32 0.0, %v816
    %v818 = vpop.f32.mrf.mxu0
    %819 = vmatprep.mubr.bf16.mxu0 %v672
    %820 = vmatmul.mubr.bf16.gmra.mxu0 %v671
    %v821 = vpop.f32.mrf.mxu0
    %v822 = vadd.f32 0.0, %v821
    %v823 = vpop.f32.mrf.mxu0
    %v824 = vpop.f32.mrf.mxu0
    %v825 = vadd.f32 0.0, %v824
    %v826 = vpop.f32.mrf.mxu0
    %827 = vmatprep.mubr.bf16.mxu0 %v674
    %828 = vmatmul.mubr.bf16.gmra.mxu0 %v673
    %v829 = vpop.f32.mrf.mxu0
    %v830 = vadd.f32 0.0, %v829
    %v831 = vpop.f32.mrf.mxu0
    %v832 = vpop.f32.mrf.mxu0
    %v833 = vadd.f32 0.0, %v832
    %v834 = vpop.f32.mrf.mxu0
    %835 = vmatprep.mubr.bf16.mxu0 %v676
    %836 = vmatmul.mubr.bf16.gmra.mxu0 %v675
    %v837 = vpop.f32.mrf.mxu0
    %v838 = vadd.f32 0.0, %v837
    %v839 = vpop.f32.mrf.mxu0
    %v840 = vpop.f32.mrf.mxu0
    %v841 = vadd.f32 0.0, %v840
    %v842 = vpop.f32.mrf.mxu0
    %843 = vmatprep.mubr.bf16.mxu0 %v678
    %844 = vmatmul.mubr.bf16.gmra.mxu0 %v677
    %v845 = vpop.f32.mrf.mxu0
    %v846 = vadd.f32 0.0, %v845
    %v847 = vpop.f32.mrf.mxu0
    %v848 = vpop.f32.mrf.mxu0
    %v849 = vadd.f32 0.0, %v848
    %v850 = vpop.f32.mrf.mxu0
    %851 = vmatprep.mubr.bf16.mxu0 %v680
    %852 = vmatmul.mubr.bf16.gmra.mxu0 %v679
    %v853 = vpop.f32.mrf.mxu0
    %v854 = vadd.f32 0.0, %v853
    %v855 = vpop.f32.mrf.mxu0
    %v856 = vpop.f32.mrf.mxu0
    %v857 = vadd.f32 0.0, %v856
    %v858 = vpop.f32.mrf.mxu0
    %859 = vmatprep.mubr.bf16.mxu0 %v682
    %860 = vmatmul.mubr.bf16.gmra.mxu0 %v681
    %v861 = vpop.f32.mrf.mxu0
    %v862 = vadd.f32 0.0, %v861
    %v863 = vpop.f32.mrf.mxu0
    %v864 = vpop.f32.mrf.mxu0
    %v865 = vadd.f32 0.0, %v864
    %v866 = vpop.f32.mrf.mxu0
    %867 = vmatprep.mubr.bf16.mxu0 %v684
    %868 = vmatmul.mubr.bf16.gmra.mxu0 %v683
    %v869 = vpop.f32.mrf.mxu0
    %v870 = vadd.f32 0.0, %v869
    %v871 = vpop.f32.mrf.mxu0
    %v872 = vpop.f32.mrf.mxu0
    %v873 = vadd.f32 0.0, %v872
    %v874 = vpop.f32.mrf.mxu0
    %875 = vmatprep.mubr.bf16.mxu0 %v686
    %876 = vmatmul.mubr.bf16.gmra.mxu0 %v685
    %v877 = vpop.f32.mrf.mxu0
    %v878 = vadd.f32 0.0, %v877
    %v879 = vpop.f32.mrf.mxu0
    %v880 = vpop.f32.mrf.mxu0
    %v881 = vadd.f32 0.0, %v880
    %v882 = vpop.f32.mrf.mxu0
    %883 = vmatprep.mubr.bf16.mxu0 %v688
    %884 = vmatmul.mubr.bf16.gmra.mxu0 %v687
    %v885 = vpop.f32.mrf.mxu0
    %v886 = vadd.f32 0.0, %v885
    %v887 = vpop.f32.mrf.mxu0
    %v888 = vpop.f32.mrf.mxu0
    %v889 = vadd.f32 0.0, %v888
    %v890 = vpop.f32.mrf.mxu0
    %891 = vmatprep.mubr.bf16.mxu0 %v690
    %892 = vmatmul.mubr.bf16.gmra.mxu0 %v689
    %v893 = vpop.f32.mrf.mxu0
    %v894 = vadd.f32 0.0, %v893
    %v895 = vpop.f32.mrf.mxu0
    %v896 = vpop.f32.mrf.mxu0
    %v897 = vadd.f32 0.0, %v896
    %v898 = vpop.f32.mrf.mxu0
    %899 = vdwg.mxu0
    %v900 = vadd.f32 %v691, %v774
    %v901 = vadd.f32 %v692, %v777
    %v902 = vadd.f32 %v693, %v782
    %v903 = vadd.f32 %v694, %v785
    %v904 = vadd.f32 %v695, %v790
    %v905 = vadd.f32 %v696, %v793
    %v906 = vadd.f32 %v697, %v798
    %v907 = vadd.f32 %v698, %v801
    %v908 = vadd.f32 %v699, %v806
    %v909 = vadd.f32 %v700, %v809
    %v910 = vadd.f32 %v701, %v814
    %v911 = vadd.f32 %v702, %v817
    %v912 = vadd.f32 %v703, %v822
    %v913 = vadd.f32 %v704, %v825
    %v914 = vadd.f32 %v705, %v830
    %v915 = vadd.f32 %v706, %v833
    %v916 = vadd.f32 %v707, %v838
    %v917 = vadd.f32 %v708, %v841
    %v918 = vadd.f32 %v709, %v846
    %v919 = vadd.f32 %v710, %v849
    %v920 = vadd.f32 %v711, %v854
    %v921 = vadd.f32 %v712, %v857
    %v922 = vadd.f32 %v713, %v862
    %v923 = vadd.f32 %v714, %v865
    %v924 = vadd.f32 %v715, %v870
    %v925 = vadd.f32 %v716, %v873
    %v926 = vadd.f32 %v717, %v878
    %v927 = vadd.f32 %v718, %v881
    %v928 = vadd.f32 %v719, %v886
    %v929 = vadd.f32 %v720, %v889
    %v930 = vadd.f32 %v721, %v894
    %v931 = vadd.f32 %v722, %v897
    %932 = vst [vmem:[#allocation2] sm:$0xff] %v900
    %933 = vst [vmem:[#allocation2 + $0x8] sm:$0xff] %v901
    %934 = vst [vmem:[#allocation2 + $0x10] sm:$0xff] %v902
    %935 = vst [vmem:[#allocation2 + $0x18] sm:$0xff] %v903
    %936 = vst [vmem:[#allocation2 + $0x20] sm:$0xff] %v904
    %937 = vst [vmem:[#allocation2 + $0x28] sm:$0xff] %v905
    %938 = vst [vmem:[#allocation2 + $0x30] sm:$0xff] %v906
    %939 = vst [vmem:[#allocation2 + $0x38] sm:$0xff] %v907
    %940 = vst [vmem:[#allocation2 + $0x40] sm:$0xff] %v908
    %941 = vst [vmem:[#allocation2 + $0x48] sm:$0xff] %v909
    %942 = vst [vmem:[#allocation2 + $0x50] sm:$0xff] %v910
    %943 = vst [vmem:[#allocation2 + $0x58] sm:$0xff] %v911
    %944 = vst [vmem:[#allocation2 + $0x60] sm:$0xff] %v912
    %945 = vst [vmem:[#allocation2 + $0x68] sm:$0xff] %v913
    %946 = vst [vmem:[#allocation2 + $0x70] sm:$0xff] %v914
    %947 = vst [vmem:[#allocation2 + $0x78] sm:$0xff] %v915
    %948 = vst [vmem:[#allocation2 + $0x80] sm:$0xff] %v916
    %949 = vst [vmem:[#allocation2 + $0x88] sm:$0xff] %v917
    %950 = vst [vmem:[#allocation2 + $0x90] sm:$0xff] %v918
    %951 = vst [vmem:[#allocation2 + $0x98] sm:$0xff] %v919
    %952 = vst [vmem:[#allocation2 + $0xa0] sm:$0xff] %v920
    %953 = vst [vmem:[#allocation2 + $0xa8] sm:$0xff] %v921
    %954 = vst [vmem:[#allocation2 + $0xb0] sm:$0xff] %v922
    %955 = vst [vmem:[#allocation2 + $0xb8] sm:$0xff] %v923
    %956 = vst [vmem:[#allocation2 + $0xc0] sm:$0xff] %v924
    %957 = vst [vmem:[#allocation2 + $0xc8] sm:$0xff] %v925
    %958 = vst [vmem:[#allocation2 + $0xd0] sm:$0xff] %v926
    %959 = vst [vmem:[#allocation2 + $0xd8] sm:$0xff] %v927
    %960 = vst [vmem:[#allocation2 + $0xe0] sm:$0xff] %v928
    %961 = vst [vmem:[#allocation2 + $0xe8] sm:$0xff] %v929
    %962 = vst [vmem:[#allocation2 + $0xf0] sm:$0xff] %v930
    %963 = vst [vmem:[#allocation2 + $0xf8] sm:$0xff] %v931
    // Predicated region
    $region30: #{tpu_custom_call.1} parent=1 // pred_check
      %p964 = pneg %p25
    $region31: #{tpu_custom_call.1} parent=1 // pred_check_branch
      %966 = sbr.rel (%p964) target = $region33
    $region32: #{tpu_custom_call.1} parent=1 // pred_region
      %v967 = vld [vmem:[#allocation2] sm:$0xff]
      %v968 = vld [vmem:[#allocation2 + $0x8] sm:$0xff]
      %v969 = vld [vmem:[#allocation2 + $0x10] sm:$0xff]
      %v970 = vld [vmem:[#allocation2 + $0x18] sm:$0xff]
      %v971 = vld [vmem:[#allocation2 + $0x20] sm:$0xff]
      %v972 = vld [vmem:[#allocation2 + $0x28] sm:$0xff]
      %v973 = vld [vmem:[#allocation2 + $0x30] sm:$0xff]
      %v974 = vld [vmem:[#allocation2 + $0x38] sm:$0xff]
      %v975 = vld [vmem:[#allocation2 + $0x40] sm:$0xff]
      %v976 = vld [vmem:[#allocation2 + $0x48] sm:$0xff]
      %v977 = vld [vmem:[#allocation2 + $0x50] sm:$0xff]
      %v978 = vld [vmem:[#allocation2 + $0x58] sm:$0xff]
      %v979 = vld [vmem:[#allocation2 + $0x60] sm:$0xff]
      %v980 = vld [vmem:[#allocation2 + $0x68] sm:$0xff]
      %v981 = vld [vmem:[#allocation2 + $0x70] sm:$0xff]
      %v982 = vld [vmem:[#allocation2 + $0x78] sm:$0xff]
      %v983 = vld [vmem:[#allocation2 + $0x80] sm:$0xff]
      %v984 = vld [vmem:[#allocation2 + $0x88] sm:$0xff]
      %v985 = vld [vmem:[#allocation2 + $0x90] sm:$0xff]
      %v986 = vld [vmem:[#allocation2 + $0x98] sm:$0xff]
      %v987 = vld [vmem:[#allocation2 + $0xa0] sm:$0xff]
      %v988 = vld [vmem:[#allocation2 + $0xa8] sm:$0xff]
      %v989 = vld [vmem:[#allocation2 + $0xb0] sm:$0xff]
      %v990 = vld [vmem:[#allocation2 + $0xb8] sm:$0xff]
      %v991 = vld [vmem:[#allocation2 + $0xc0] sm:$0xff]
      %v992 = vld [vmem:[#allocation2 + $0xc8] sm:$0xff]
      %v993 = vld [vmem:[#allocation2 + $0xd0] sm:$0xff]
      %v994 = vld [vmem:[#allocation2 + $0xd8] sm:$0xff]
      %v995 = vld [vmem:[#allocation2 + $0xe0] sm:$0xff]
      %v996 = vld [vmem:[#allocation2 + $0xe8] sm:$0xff]
      %v997 = vld [vmem:[#allocation2 + $0xf0] sm:$0xff]
      %v998 = vld [vmem:[#allocation2 + $0xf8] sm:$0xff]
      %v999 = vld [vmem:[%s5] sm:$0xff]
      %v1000 = vld [vmem:[%s5 + $0x8] sm:$0xff]
      %v1001 = vld [vmem:[%s5 + $0x10] sm:$0xff]
      %v1002 = vld [vmem:[%s5 + $0x18] sm:$0xff]
      %v1003 = vld [vmem:[%s5 + $0x20] sm:$0xff]
      %v1004 = vld [vmem:[%s5 + $0x28] sm:$0xff]
      %v1005 = vld [vmem:[%s5 + $0x30] sm:$0xff]
      %v1006 = vld [vmem:[%s5 + $0x38] sm:$0xff]
      %v1007 = vld [vmem:[%s5 + $0x40] sm:$0xff]
      %v1008 = vld [vmem:[%s5 + $0x48] sm:$0xff]
      %v1009 = vld [vmem:[%s5 + $0x50] sm:$0xff]
      %v1010 = vld [vmem:[%s5 + $0x58] sm:$0xff]
      %v1011 = vld [vmem:[%s5 + $0x60] sm:$0xff]
      %v1012 = vld [vmem:[%s5 + $0x68] sm:$0xff]
      %v1013 = vld [vmem:[%s5 + $0x70] sm:$0xff]
      %v1014 = vld [vmem:[%s5 + $0x78] sm:$0xff]
      %v1015 = vld [vmem:[%s5 + $0x80] sm:$0xff]
      %v1016 = vld [vmem:[%s5 + $0x88] sm:$0xff]
      %v1017 = vld [vmem:[%s5 + $0x90] sm:$0xff]
      %v1018 = vld [vmem:[%s5 + $0x98] sm:$0xff]
      %v1019 = vld [vmem:[%s5 + $0xa0] sm:$0xff]
      %v1020 = vld [vmem:[%s5 + $0xa8] sm:$0xff]
      %v1021 = vld [vmem:[%s5 + $0xb0] sm:$0xff]
      %v1022 = vld [vmem:[%s5 + $0xb8] sm:$0xff]
      %v1023 = vld [vmem:[%s5 + $0xc0] sm:$0xff]
      %v1024 = vld [vmem:[%s5 + $0xc8] sm:$0xff]
      %v1025 = vld [vmem:[%s5 + $0xd0] sm:$0xff]
      %v1026 = vld [vmem:[%s5 + $0xd8] sm:$0xff]
      %v1027 = vld [vmem:[%s5 + $0xe0] sm:$0xff]
      %v1028 = vld [vmem:[%s5 + $0xe8] sm:$0xff]
      %v1029 = vld [vmem:[%s5 + $0xf0] sm:$0xff]
      %v1030 = vld [vmem:[%s5 + $0xf8] sm:$0xff]
      %1032 = vset.pattern.permute.xlu0 0
      %1033 = vperm.xlu0 %1032, %v999
      %v1034 = vpop.permute.xlu0 %1033
      %1037 = vset.pattern.permute.xlu0 0
      %1038 = vperm.xlu0 %1037, %v1000
      %v1039 = vpop.permute.xlu0 %1038
      %1042 = vset.pattern.permute.xlu0 0
      %1043 = vperm.xlu0 %1042, %v1001
      %v1044 = vpop.permute.xlu0 %1043
      %1047 = vset.pattern.permute.xlu0 0
      %1048 = vperm.xlu0 %1047, %v1002
      %v1049 = vpop.permute.xlu0 %1048
      %1052 = vset.pattern.permute.xlu0 0
      %1053 = vperm.xlu0 %1052, %v1003
      %v1054 = vpop.permute.xlu0 %1053
      %1057 = vset.pattern.permute.xlu0 0
      %1058 = vperm.xlu0 %1057, %v1004
      %v1059 = vpop.permute.xlu0 %1058
      %1062 = vset.pattern.permute.xlu0 0
      %1063 = vperm.xlu0 %1062, %v1005
      %v1064 = vpop.permute.xlu0 %1063
      %1067 = vset.pattern.permute.xlu0 0
      %1068 = vperm.xlu0 %1067, %v1006
      %v1069 = vpop.permute.xlu0 %1068
      %1072 = vset.pattern.permute.xlu0 0
      %1073 = vperm.xlu0 %1072, %v1007
      %v1074 = vpop.permute.xlu0 %1073
      %1077 = vset.pattern.permute.xlu0 0
      %1078 = vperm.xlu0 %1077, %v1008
      %v1079 = vpop.permute.xlu0 %1078
      %1082 = vset.pattern.permute.xlu0 0
      %1083 = vperm.xlu0 %1082, %v1009
      %v1084 = vpop.permute.xlu0 %1083
      %1087 = vset.pattern.permute.xlu0 0
      %1088 = vperm.xlu0 %1087, %v1010
      %v1089 = vpop.permute.xlu0 %1088
      %1092 = vset.pattern.permute.xlu0 0
      %1093 = vperm.xlu0 %1092, %v1011
      %v1094 = vpop.permute.xlu0 %1093
      %1097 = vset.pattern.permute.xlu0 0
      %1098 = vperm.xlu0 %1097, %v1012
      %v1099 = vpop.permute.xlu0 %1098
      %1102 = vset.pattern.permute.xlu0 0
      %1103 = vperm.xlu0 %1102, %v1013
      %v1104 = vpop.permute.xlu0 %1103
      %1107 = vset.pattern.permute.xlu0 0
      %1108 = vperm.xlu0 %1107, %v1014
      %v1109 = vpop.permute.xlu0 %1108
      %1112 = vset.pattern.permute.xlu0 0
      %1113 = vperm.xlu0 %1112, %v1015
      %v1114 = vpop.permute.xlu0 %1113
      %1117 = vset.pattern.permute.xlu0 0
      %1118 = vperm.xlu0 %1117, %v1016
      %v1119 = vpop.permute.xlu0 %1118
      %1122 = vset.pattern.permute.xlu0 0
      %1123 = vperm.xlu0 %1122, %v1017
      %v1124 = vpop.permute.xlu0 %1123
      %1127 = vset.pattern.permute.xlu0 0
      %1128 = vperm.xlu0 %1127, %v1018
      %v1129 = vpop.permute.xlu0 %1128
      %1132 = vset.pattern.permute.xlu0 0
      %1133 = vperm.xlu0 %1132, %v1019
      %v1134 = vpop.permute.xlu0 %1133
      %1137 = vset.pattern.permute.xlu0 0
      %1138 = vperm.xlu0 %1137, %v1020
      %v1139 = vpop.permute.xlu0 %1138
      %1142 = vset.pattern.permute.xlu0 0
      %1143 = vperm.xlu0 %1142, %v1021
      %v1144 = vpop.permute.xlu0 %1143
      %1147 = vset.pattern.permute.xlu0 0
      %1148 = vperm.xlu0 %1147, %v1022
      %v1149 = vpop.permute.xlu0 %1148
      %1152 = vset.pattern.permute.xlu0 0
      %1153 = vperm.xlu0 %1152, %v1023
      %v1154 = vpop.permute.xlu0 %1153
      %1157 = vset.pattern.permute.xlu0 0
      %1158 = vperm.xlu0 %1157, %v1024
      %v1159 = vpop.permute.xlu0 %1158
      %1162 = vset.pattern.permute.xlu0 0
      %1163 = vperm.xlu0 %1162, %v1025
      %v1164 = vpop.permute.xlu0 %1163
      %1167 = vset.pattern.permute.xlu0 0
      %1168 = vperm.xlu0 %1167, %v1026
      %v1169 = vpop.permute.xlu0 %1168
      %1172 = vset.pattern.permute.xlu0 0
      %1173 = vperm.xlu0 %1172, %v1027
      %v1174 = vpop.permute.xlu0 %1173
      %1177 = vset.pattern.permute.xlu0 0
      %1178 = vperm.xlu0 %1177, %v1028
      %v1179 = vpop.permute.xlu0 %1178
      %1182 = vset.pattern.permute.xlu0 0
      %1183 = vperm.xlu0 %1182, %v1029
      %v1184 = vpop.permute.xlu0 %1183
      %1187 = vset.pattern.permute.xlu0 0
      %1188 = vperm.xlu0 %1187, %v1030
      %v1189 = vpop.permute.xlu0 %1188
      %v1191 = vmul.f32 %v967, %v1034
      %v1192 = vmul.f32 %v968, %v1039
      %v1193 = vmul.f32 %v969, %v1044
      %v1194 = vmul.f32 %v970, %v1049
      %v1195 = vmul.f32 %v971, %v1054
      %v1196 = vmul.f32 %v972, %v1059
      %v1197 = vmul.f32 %v973, %v1064
      %v1198 = vmul.f32 %v974, %v1069
      %v1199 = vmul.f32 %v975, %v1074
      %v1200 = vmul.f32 %v976, %v1079
      %v1201 = vmul.f32 %v977, %v1084
      %v1202 = vmul.f32 %v978, %v1089
      %v1203 = vmul.f32 %v979, %v1094
      %v1204 = vmul.f32 %v980, %v1099
      %v1205 = vmul.f32 %v981, %v1104
      %v1206 = vmul.f32 %v982, %v1109
      %v1207 = vmul.f32 %v983, %v1114
      %v1208 = vmul.f32 %v984, %v1119
      %v1209 = vmul.f32 %v985, %v1124
      %v1210 = vmul.f32 %v986, %v1129
      %v1211 = vmul.f32 %v987, %v1134
      %v1212 = vmul.f32 %v988, %v1139
      %v1213 = vmul.f32 %v989, %v1144
      %v1214 = vmul.f32 %v990, %v1149
      %v1215 = vmul.f32 %v991, %v1154
      %v1216 = vmul.f32 %v992, %v1159
      %v1217 = vmul.f32 %v993, %v1164
      %v1218 = vmul.f32 %v994, %v1169
      %v1219 = vmul.f32 %v995, %v1174
      %v1220 = vmul.f32 %v996, %v1179
      %v1221 = vmul.f32 %v997, %v1184
      %v1222 = vmul.f32 %v998, %v1189
      %v1223 = vld [vmem:[%s3] sm:$0x1]
      %v1225 = vlaneseq
      %v1226 = vshrl.u32 %v1225, 7
      %v1227 = vsub.s32 0, %v1226
      %v1228 = vrot.slane %v1223, %v1227
      %v1230 = vadd.f32 %v1191, %v1228
      %v1231 = vadd.f32 %v1192, %v1228
      %v1232 = vadd.f32 %v1193, %v1228
      %v1233 = vadd.f32 %v1194, %v1228
      %v1234 = vadd.f32 %v1195, %v1228
      %v1235 = vadd.f32 %v1196, %v1228
      %v1236 = vadd.f32 %v1197, %v1228
      %v1237 = vadd.f32 %v1198, %v1228
      %v1238 = vadd.f32 %v1199, %v1228
      %v1239 = vadd.f32 %v1200, %v1228
      %v1240 = vadd.f32 %v1201, %v1228
      %v1241 = vadd.f32 %v1202, %v1228
      %v1242 = vadd.f32 %v1203, %v1228
      %v1243 = vadd.f32 %v1204, %v1228
      %v1244 = vadd.f32 %v1205, %v1228
      %v1245 = vadd.f32 %v1206, %v1228
      %v1246 = vadd.f32 %v1207, %v1228
      %v1247 = vadd.f32 %v1208, %v1228
      %v1248 = vadd.f32 %v1209, %v1228
      %v1249 = vadd.f32 %v1210, %v1228
      %v1250 = vadd.f32 %v1211, %v1228
      %v1251 = vadd.f32 %v1212, %v1228
      %v1252 = vadd.f32 %v1213, %v1228
      %v1253 = vadd.f32 %v1214, %v1228
      %v1254 = vadd.f32 %v1215, %v1228
      %v1255 = vadd.f32 %v1216, %v1228
      %v1256 = vadd.f32 %v1217, %v1228
      %v1257 = vadd.f32 %v1218, %v1228
      %v1258 = vadd.f32 %v1219, %v1228
      %v1259 = vadd.f32 %v1220, %v1228
      %v1260 = vadd.f32 %v1221, %v1228
      %v1261 = vadd.f32 %v1222, %v1228
      %v1262 = vmax.f32 %v1230, 0.0
      %v1263 = vmax.f32 %v1231, 0.0
      %v1264 = vmax.f32 %v1232, 0.0
      %v1265 = vmax.f32 %v1233, 0.0
      %v1266 = vmax.f32 %v1234, 0.0
      %v1267 = vmax.f32 %v1235, 0.0
      %v1268 = vmax.f32 %v1236, 0.0
      %v1269 = vmax.f32 %v1237, 0.0
      %v1270 = vmax.f32 %v1238, 0.0
      %v1271 = vmax.f32 %v1239, 0.0
      %v1272 = vmax.f32 %v1240, 0.0
      %v1273 = vmax.f32 %v1241, 0.0
      %v1274 = vmax.f32 %v1242, 0.0
      %v1275 = vmax.f32 %v1243, 0.0
      %v1276 = vmax.f32 %v1244, 0.0
      %v1277 = vmax.f32 %v1245, 0.0
      %v1278 = vmax.f32 %v1246, 0.0
      %v1279 = vmax.f32 %v1247, 0.0
      %v1280 = vmax.f32 %v1248, 0.0
      %v1281 = vmax.f32 %v1249, 0.0
      %v1282 = vmax.f32 %v1250, 0.0
      %v1283 = vmax.f32 %v1251, 0.0
      %v1284 = vmax.f32 %v1252, 0.0
      %v1285 = vmax.f32 %v1253, 0.0
      %v1286 = vmax.f32 %v1254, 0.0
      %v1287 = vmax.f32 %v1255, 0.0
      %v1288 = vmax.f32 %v1256, 0.0
      %v1289 = vmax.f32 %v1257, 0.0
      %v1290 = vmax.f32 %v1258, 0.0
      %v1291 = vmax.f32 %v1259, 0.0
      %v1292 = vmax.f32 %v1260, 0.0
      %v1293 = vmax.f32 %v1261, 0.0
      %v1294 = vpack.c.bf16 %v1263, %v1262
      %v1295 = vpack.c.bf16 %v1265, %v1264
      %v1296 = vpack.c.bf16 %v1267, %v1266
      %v1297 = vpack.c.bf16 %v1269, %v1268
      %v1298 = vpack.c.bf16 %v1271, %v1270
      %v1299 = vpack.c.bf16 %v1273, %v1272
      %v1300 = vpack.c.bf16 %v1275, %v1274
      %v1301 = vpack.c.bf16 %v1277, %v1276
      %v1302 = vpack.c.bf16 %v1279, %v1278
      %v1303 = vpack.c.bf16 %v1281, %v1280
      %v1304 = vpack.c.bf16 %v1283, %v1282
      %v1305 = vpack.c.bf16 %v1285, %v1284
      %v1306 = vpack.c.bf16 %v1287, %v1286
      %v1307 = vpack.c.bf16 %v1289, %v1288
      %v1308 = vpack.c.bf16 %v1291, %v1290
      %v1309 = vpack.c.bf16 %v1293, %v1292
      %v1326 = vunpack.c.l.b16 %v1294
      %v1327 = vunpack.c.h.b16 %v1294
      %v1328 = vunpack.c.l.b16 %v1295
      %v1329 = vunpack.c.h.b16 %v1295
      %v1330 = vunpack.c.l.b16 %v1296
      %v1331 = vunpack.c.h.b16 %v1296
      %v1332 = vunpack.c.l.b16 %v1297
      %v1333 = vunpack.c.h.b16 %v1297
      %v1334 = vunpack.c.l.b16 %v1298
      %v1335 = vunpack.c.h.b16 %v1298
      %v1336 = vunpack.c.l.b16 %v1299
      %v1337 = vunpack.c.h.b16 %v1299
      %v1338 = vunpack.c.l.b16 %v1300
      %v1339 = vunpack.c.h.b16 %v1300
      %v1340 = vunpack.c.l.b16 %v1301
      %v1341 = vunpack.c.h.b16 %v1301
      %v1342 = vunpack.c.l.b16 %v1302
      %v1343 = vunpack.c.h.b16 %v1302
      %v1344 = vunpack.c.l.b16 %v1303
      %v1345 = vunpack.c.h.b16 %v1303
      %v1346 = vunpack.c.l.b16 %v1304
      %v1347 = vunpack.c.h.b16 %v1304
      %v1348 = vunpack.c.l.b16 %v1305
      %v1349 = vunpack.c.h.b16 %v1305
      %v1350 = vunpack.c.l.b16 %v1306
      %v1351 = vunpack.c.h.b16 %v1306
      %v1352 = vunpack.c.l.b16 %v1307
      %v1353 = vunpack.c.h.b16 %v1307
      %v1354 = vunpack.c.l.b16 %v1308
      %v1355 = vunpack.c.h.b16 %v1308
      %v1356 = vunpack.c.l.b16 %v1309
      %v1357 = vunpack.c.h.b16 %v1309
      %v1358 = vpack.c.b16 %v1326, %v1326
      %v1359 = vpack.c.b16 %v1327, %v1327
      %v1360 = vpack.c.b16 %v1328, %v1328
      %v1361 = vpack.c.b16 %v1329, %v1329
      %v1362 = vpack.c.b16 %v1330, %v1330
      %v1363 = vpack.c.b16 %v1331, %v1331
      %v1364 = vpack.c.b16 %v1332, %v1332
      %v1365 = vpack.c.b16 %v1333, %v1333
      %v1366 = vpack.c.b16 %v1334, %v1334
      %v1367 = vpack.c.b16 %v1335, %v1335
      %v1368 = vpack.c.b16 %v1336, %v1336
      %v1369 = vpack.c.b16 %v1337, %v1337
      %v1370 = vpack.c.b16 %v1338, %v1338
      %v1371 = vpack.c.b16 %v1339, %v1339
      %v1372 = vpack.c.b16 %v1340, %v1340
      %v1373 = vpack.c.b16 %v1341, %v1341
      %v1374 = vpack.c.b16 %v1342, %v1342
      %v1375 = vpack.c.b16 %v1343, %v1343
      %v1376 = vpack.c.b16 %v1344, %v1344
      %v1377 = vpack.c.b16 %v1345, %v1345
      %v1378 = vpack.c.b16 %v1346, %v1346
      %v1379 = vpack.c.b16 %v1347, %v1347
      %v1380 = vpack.c.b16 %v1348, %v1348
      %v1381 = vpack.c.b16 %v1349, %v1349
      %v1382 = vpack.c.b16 %v1350, %v1350
      %v1383 = vpack.c.b16 %v1351, %v1351
      %v1384 = vpack.c.b16 %v1352, %v1352
      %v1385 = vpack.c.b16 %v1353, %v1353
      %v1386 = vpack.c.b16 %v1354, %v1354
      %v1387 = vpack.c.b16 %v1355, %v1355
      %v1388 = vpack.c.b16 %v1356, %v1356
      %v1389 = vpack.c.b16 %v1357, %v1357
      %1422 = vst [vmem:[#allocation3] sm:$0xf] %v1358
      %1423 = vst [vmem:[#allocation3 + $0x4] sm:$0xf] %v1359
      %1424 = vst [vmem:[#allocation3 + $0x8] sm:$0xf] %v1360
      %1425 = vst [vmem:[#allocation3 + $0xc] sm:$0xf] %v1361
      %1426 = vst [vmem:[#allocation3 + $0x10] sm:$0xf] %v1362
      %1427 = vst [vmem:[#allocation3 + $0x14] sm:$0xf] %v1363
      %1428 = vst [vmem:[#allocation3 + $0x18] sm:$0xf] %v1364
      %1429 = vst [vmem:[#allocation3 + $0x1c] sm:$0xf] %v1365
      %1430 = vst [vmem:[#allocation3 + $0x20] sm:$0xf] %v1366
      %1431 = vst [vmem:[#allocation3 + $0x24] sm:$0xf] %v1367
      %1432 = vst [vmem:[#allocation3 + $0x28] sm:$0xf] %v1368
      %1433 = vst [vmem:[#allocation3 + $0x2c] sm:$0xf] %v1369
      %1434 = vst [vmem:[#allocation3 + $0x30] sm:$0xf] %v1370
      %1435 = vst [vmem:[#allocation3 + $0x34] sm:$0xf] %v1371
      %1436 = vst [vmem:[#allocation3 + $0x38] sm:$0xf] %v1372
      %1437 = vst [vmem:[#allocation3 + $0x3c] sm:$0xf] %v1373
      %1438 = vst [vmem:[#allocation3 + $0x40] sm:$0xf] %v1374
      %1439 = vst [vmem:[#allocation3 + $0x44] sm:$0xf] %v1375
      %1440 = vst [vmem:[#allocation3 + $0x48] sm:$0xf] %v1376
      %1441 = vst [vmem:[#allocation3 + $0x4c] sm:$0xf] %v1377
      %1442 = vst [vmem:[#allocation3 + $0x50] sm:$0xf] %v1378
      %1443 = vst [vmem:[#allocation3 + $0x54] sm:$0xf] %v1379
      %1444 = vst [vmem:[#allocation3 + $0x58] sm:$0xf] %v1380
      %1445 = vst [vmem:[#allocation3 + $0x5c] sm:$0xf] %v1381
      %1446 = vst [vmem:[#allocation3 + $0x60] sm:$0xf] %v1382
      %1447 = vst [vmem:[#allocation3 + $0x64] sm:$0xf] %v1383
      %1448 = vst [vmem:[#allocation3 + $0x68] sm:$0xf] %v1384
      %1449 = vst [vmem:[#allocation3 + $0x6c] sm:$0xf] %v1385
      %1450 = vst [vmem:[#allocation3 + $0x70] sm:$0xf] %v1386
      %1451 = vst [vmem:[#allocation3 + $0x74] sm:$0xf] %v1387
      %1452 = vst [vmem:[#allocation3 + $0x78] sm:$0xf] %v1388
      %1453 = vst [vmem:[#allocation3 + $0x7c] sm:$0xf] %v1389
    $region33: #{tpu_custom_call.1} parent=1 // pred_fallthru
      _
    // Predicated region
    $region34: #{tpu_custom_call.1} parent=1 // pred_check
      _
    $region35: #{tpu_custom_call.1} parent=1 // pred_check_branch
      %1455 = sbr.rel (0) target = $region37
    $region36: #{tpu_custom_call.1} parent=1 // pred_region
      %s1457 = ssub.s32 2048, 2048
      %1458 = vsyncadd [#allocation4], %s1457
      %s1459 = sshll.u32 [#allocation3], 4
      %s1460 = int_to_ptr.vmem [resolvable:$true] %s1459
      %1465 = dma.vmem_to_hbm [thread:$0]  %s1460, 2048, %s6, [#allocation4], 64, 64, 4
    $region37: #{tpu_custom_call.1} parent=1 // pred_fallthru
      _
    // Predicated region
    $region38: #{tpu_custom_call.1} parent=1 // pred_check
      _
    $region39: #{tpu_custom_call.1} parent=1 // pred_check_branch
      %1467 = sbr.rel (0) target = $region41
    $region40: #{tpu_custom_call.1} parent=1 // pred_region
      %1468 = dma.done [#allocation4], 2048
    $region41: #{tpu_custom_call.1} parent=1 // pred_fallthru
      _
    %1469 = vsyncpa [#allocation4], 1

</llo_original>
